<compile_context>
chip_gen: v7x
topology: tpu7x:2x2x1
jax: 0.10.0
libtpu: 0.0.40
codegen_flags: <defaults>
</compile_context>

<pallas_src>
import jax
import jax.numpy as jnp
from jax.experimental import pallas as pl
from jax.experimental.pallas import tpu as pltpu

EPS = 1e-5
C_PAD = 8  # pad channels 4 -> 8 so W * C_PAD = 128 (full vreg / MXU lane tile)


def _resnet_block_kernel(x_ref, su_ref, sd_ref, wb1_ref, b1_ref, wb2_ref,
                         b2_ref, gamma_ref, beta_ref, p2_ref, out_ref):
    # x_ref/out_ref : (N*H, W*C_PAD)       lane-dense activations (128 lanes)
    # su/sd_ref     : (N*H, N*H)           vertical-shift matrices (h-1 / h+1)
    # wb*_ref       : (3*WC, WC)           dy-stacked banded conv weights
    # b*_ref        : (1, WC)              bias tiled over W
    # gamma/beta    : (1, WC)              BN affine tiled over W
    # p2_ref        : (2*WC, 2*WC)         block-diag per-channel avg+broadcast
    wc = x_ref.shape[1]

    x = x_ref[...]
    su = su_ref[...]
    sd = sd_ref[...]
    gamma = gamma_ref[...]
    beta = beta_ref[...]
    p2 = p2_ref[...]

    def conv3x3(v, wb_ref, b_ref):
        # Vertical taps: banded left-multiplies (zero rows at image edges).
        v_up = jnp.dot(su, v, preferred_element_type=jnp.float32)   # row h-1
        v_dn = jnp.dot(sd, v, preferred_element_type=jnp.float32)   # row h+1
        # Lane-tile-aligned K concat -> one stacked matmul (in-MXU K accumulate).
        vcat = jnp.concatenate([v_up, v, v_dn], axis=1)             # (NH, 3*WC)
        return jnp.dot(vcat, wb_ref[...],
                       preferred_element_type=jnp.float32) + b_ref[...]

    def batchnorm(y):
        # Single traversal for sum and sum-of-squares (sublane reduce), then one
        # tiny matmul averages per channel and broadcasts back onto the lanes.
        cat = jnp.concatenate([y, y * y], axis=1)                   # (NH, 2*WC)
        s = jnp.sum(cat, axis=0, keepdims=True)                     # (1, 2*WC)
        stats = jnp.dot(s, p2, preferred_element_type=jnp.float32)  # (1, 2*WC)
        mean = stats[:, :wc]
        var = jnp.maximum(stats[:, wc:] - mean * mean, 0.0)         # biased, clamped
        scale = gamma * jax.lax.rsqrt(var + EPS)
        shift = beta - mean * scale
        return y * scale + shift

    h1 = jnp.maximum(batchnorm(conv3x3(x, wb1_ref, b1_ref)), 0.0)   # ReLU
    out_ref[...] = batchnorm(conv3x3(h1, wb2_ref, b2_ref)) + x      # +residual


def _banded_weights_stacked(w_oihw, w, c_pad):
    """PyTorch (Co,Ci,3,3) weight -> (3*W*c_pad, W*c_pad) dy-stacked band matrix.

    Block dy, entry [(wo+dx-1)*c_pad + ci, wo*c_pad + co] = weight[co, ci, dy, dx];
    rows outside [0, W) are absent, which encodes the zero padding along W.
    Extra (padded) in/out channels carry zero weights.
    """
    c = w_oihw.shape[0]
    w_hwio = jnp.transpose(w_oihw.astype(jnp.float32), (2, 3, 1, 0))  # (3,3,Ci,Co)
    w_hwio = jnp.pad(w_hwio, ((0, 0), (0, 0), (0, c_pad - c), (0, c_pad - c)))
    mats = []
    for dy in range(3):
        m = jnp.zeros((w * c_pad, w * c_pad), jnp.float32)
        for dx in range(3):
            shift = jnp.eye(w, k=1 - dx, dtype=jnp.float32)
            m = m + jnp.kron(shift, w_hwio[dy, dx])
        mats.append(m)
    return jnp.concatenate(mats, axis=0)


def prepare_params(w1_oihw, b1, w2_oihw, b2, gamma, beta, n, h, w):
    """Weight-update-time precompute: build all constant kernel operands once."""
    c = w1_oihw.shape[0]
    inv_count = 1.0 / float(n * h * w)

    def pad_c(v):
        return jnp.pad(v.astype(jnp.float32), (0, C_PAD - c))

    wb1 = _banded_weights_stacked(w1_oihw, w, C_PAD)
    wb2 = _banded_weights_stacked(w2_oihw, w, C_PAD)
    b1t = jnp.tile(pad_c(b1), w)[None, :]                # (1, WC)
    b2t = jnp.tile(pad_c(b2), w)[None, :]
    gwc = jnp.tile(pad_c(gamma), w)[None, :]             # padded gamma = 0
    bwc = jnp.tile(pad_c(beta), w)[None, :]              # padded beta  = 0

    # Per-channel average + broadcast in lane space, 1/count folded in.
    p = inv_count * jnp.kron(jnp.ones((w, w), jnp.float32),
                             jnp.eye(C_PAD, dtype=jnp.float32))      # (WC, WC)
    z = jnp.zeros_like(p)
    p2 = jnp.concatenate([jnp.concatenate([p, z], axis=1),
                          jnp.concatenate([z, p], axis=1)], axis=0)  # (2WC, 2WC)

    # Vertical shift matrices: block-diagonal per image -> no cross-image bleed,
    # zero rows at the top/bottom image edges (the H zero-padding of the conv).
    s_up = jnp.kron(jnp.eye(n, dtype=jnp.float32),
                    jnp.eye(h, k=-1, dtype=jnp.float32))             # out[r]=in[r-1]
    s_dn = jnp.kron(jnp.eye(n, dtype=jnp.float32),
                    jnp.eye(h, k=1, dtype=jnp.float32))              # out[r]=in[r+1]

    return dict(wb1=wb1, b1t=b1t, wb2=wb2, b2t=b2t, gwc=gwc, bwc=bwc,
                p2=p2, s_up=s_up, s_dn=s_dn)


@jax.jit
def resnet_block_apply(x_nchw, params):
    """PyTorch-facing forward: NCHW in, NCHW out (layout glue only)."""
    n, c, h, w = x_nchw.shape
    wc = w * C_PAD
    nh = n * h

    x_nhwc = jnp.transpose(x_nchw, (0, 2, 3, 1)).astype(jnp.float32)
    x_nhwc = jnp.pad(x_nhwc, ((0, 0), (0, 0), (0, 0), (0, C_PAD - c)))
    x2d = x_nhwc.reshape(nh, wc)

    def full(shape):
        nd = len(shape)
        return pl.BlockSpec(shape, lambda i, nd=nd: (0,) * nd)

    y2d = pl.pallas_call(
        _resnet_block_kernel,
        out_shape=jax.ShapeDtypeStruct((nh, wc), jnp.float32),
        grid=(1,),
        in_specs=[
            full((nh, wc)),          # x
            full((nh, nh)),          # S_up
            full((nh, nh)),          # S_dn
            full((3 * wc, wc)),      # banded w1 (dy-stacked)
            full((1, wc)),           # b1 tiled
            full((3 * wc, wc)),      # banded w2
            full((1, wc)),           # b2 tiled
            full((1, wc)),           # gamma tiled
            full((1, wc)),           # beta tiled
            full((2 * wc, 2 * wc)),  # P2
        ],
        out_specs=full((nh, wc)),
        compiler_params=pltpu.CompilerParams(
            dimension_semantics=("arbitrary",),
            vmem_limit_bytes=32 * 1024 * 1024),
    )(x2d, params["s_up"], params["s_dn"],
      params["wb1"], params["b1t"], params["wb2"], params["b2t"],
      params["gwc"], params["bwc"], params["p2"])

    y = y2d.reshape(n, h, w, C_PAD)[..., :c]
    return jnp.transpose(y, (0, 3, 1, 2))


def _reference_nhwc(x, w1_hwio, b1, w2_hwio, b2, gamma, beta):
    """Pure-JAX reference (same training-mode BN semantics) for validation."""
    def conv(v, w, b):
        return jax.lax.conv_general_dilated(
            v, w, window_strides=(1, 1), padding="SAME",
            dimension_numbers=("NHWC", "HWIO", "NHWC"),
            precision=jax.lax.Precision.HIGHEST) + b

    def bn(v):
        m = jnp.mean(v, axis=(0, 1, 2))
        var = jnp.maximum(jnp.mean(v * v, axis=(0, 1, 2)) - m * m, 0.0)
        return (v - m) * (gamma * jax.lax.rsqrt(var + EPS)) + beta

    h = jnp.maximum(bn(conv(x, w1_hwio, b1)), 0.0)
    return bn(conv(h, w2_hwio, b2)) + x


if __name__ == "__main__":
    key = jax.random.PRNGKey(0)
    kx, kw1, kb1, kw2, kb2 = jax.random.split(key, 5)

    N, C, H, W = 2, 4, 16, 16
    x_nchw = jax.random.normal(kx, (N, C, H, W), dtype=jnp.float32)

    # Deterministic synthetic parameters (shapes per nn.Conv2d / nn.BatchNorm2d)
    w1 = 0.1 * jax.random.normal(kw1, (C, C, 3, 3), dtype=jnp.float32)  # OIHW
    b1 = 0.1 * jax.random.normal(kb1, (C,), dtype=jnp.float32)
    w2 = 0.1 * jax.random.normal(kw2, (C, C, 3, 3), dtype=jnp.float32)  # OIHW
    b2 = 0.1 * jax.random.normal(kb2, (C,), dtype=jnp.float32)
    gamma = jnp.ones((C,), dtype=jnp.float32)   # BatchNorm2d default weight
    beta = jnp.zeros((C,), dtype=jnp.float32)   # BatchNorm2d default bias

    # Precompute constant operands once (amortized across forward calls).
    params = prepare_params(w1, b1, w2, b2, gamma, beta, N, H, W)

    out = resnet_block_apply(x_nchw, params)
    out = jax.block_until_ready(out)

    # Validate against a pure-JAX reference (tolerance covers MXU f32
    # pass-decomposition vs HIGHEST-precision XLA conv).
    x_nhwc = jnp.transpose(x_nchw, (0, 2, 3, 1))
    ref = _reference_nhwc(x_nhwc,
                          jnp.transpose(w1, (2, 3, 1, 0)), b1,
                          jnp.transpose(w2, (2, 3, 1, 0)), b2,
                          gamma, beta)
    ref_nchw = jnp.transpose(ref, (0, 3, 1, 2))
    assert out.shape == x_nchw.shape and out.dtype == jnp.float32
    assert jnp.allclose(out, ref_nchw, rtol=1e-2, atol=1e-2), "mismatch vs reference"

    print("KERNEL_OK")
</pallas_src>

<mosaic_0001>
module attributes {stable_mosaic.version = 11 : i64} {
  func.func @_resnet_block_kernel(%arg0: i32, %arg1: memref<32x128xf32, #tpu.memory_space<vmem>>, %arg2: memref<32x32xf32, #tpu.memory_space<vmem>>, %arg3: memref<32x32xf32, #tpu.memory_space<vmem>>, %arg4: memref<384x128xf32, #tpu.memory_space<vmem>>, %arg5: memref<1x128xf32, #tpu.memory_space<vmem>>, %arg6: memref<384x128xf32, #tpu.memory_space<vmem>>, %arg7: memref<1x128xf32, #tpu.memory_space<vmem>>, %arg8: memref<1x128xf32, #tpu.memory_space<vmem>>, %arg9: memref<1x128xf32, #tpu.memory_space<vmem>>, %arg10: memref<256x256xf32, #tpu.memory_space<vmem>>, %arg11: memref<32x128xf32, #tpu.memory_space<vmem>>) attributes {dimension_semantics = [#tpu.dimension_semantics<arbitrary>], iteration_bounds = array<i64: 1>, scalar_prefetch = 0 : i64, scratch_operands = 0 : i64, tpu.core_type = #tpu.core_type<tc>, window_params = [{pipeline_mode = #tpu.pipeline_mode<synchronous>, transform_indices = @transform_0, window_bounds = array<i64: 32, 128>}, {pipeline_mode = #tpu.pipeline_mode<synchronous>, transform_indices = @transform_1, window_bounds = array<i64: 32, 32>}, {pipeline_mode = #tpu.pipeline_mode<synchronous>, transform_indices = @transform_2, window_bounds = array<i64: 32, 32>}, {pipeline_mode = #tpu.pipeline_mode<synchronous>, transform_indices = @transform_3, window_bounds = array<i64: 384, 128>}, {pipeline_mode = #tpu.pipeline_mode<synchronous>, transform_indices = @transform_4, window_bounds = array<i64: 1, 128>}, {pipeline_mode = #tpu.pipeline_mode<synchronous>, transform_indices = @transform_5, window_bounds = array<i64: 384, 128>}, {pipeline_mode = #tpu.pipeline_mode<synchronous>, transform_indices = @transform_6, window_bounds = array<i64: 1, 128>}, {pipeline_mode = #tpu.pipeline_mode<synchronous>, transform_indices = @transform_7, window_bounds = array<i64: 1, 128>}, {pipeline_mode = #tpu.pipeline_mode<synchronous>, transform_indices = @transform_8, window_bounds = array<i64: 1, 128>}, {pipeline_mode = #tpu.pipeline_mode<synchronous>, transform_indices = @transform_9, window_bounds = array<i64: 256, 256>}, {pipeline_mode = #tpu.pipeline_mode<synchronous>, transform_indices = @transform_10, window_bounds = array<i64: 32, 128>}]} {
    %c0 = arith.constant 0 : index
    %c0_0 = arith.constant 0 : index
    %0 = vector.load %arg1[%c0, %c0_0] : memref<32x128xf32, #tpu.memory_space<vmem>>, vector<32x128xf32>
    %c0_1 = arith.constant 0 : index
    %c0_2 = arith.constant 0 : index
    %1 = vector.load %arg2[%c0_1, %c0_2] : memref<32x32xf32, #tpu.memory_space<vmem>>, vector<32x32xf32>
    %c0_3 = arith.constant 0 : index
    %c0_4 = arith.constant 0 : index
    %2 = vector.load %arg3[%c0_3, %c0_4] : memref<32x32xf32, #tpu.memory_space<vmem>>, vector<32x32xf32>
    %c0_5 = arith.constant 0 : index
    %c0_6 = arith.constant 0 : index
    %3 = vector.load %arg8[%c0_5, %c0_6] : memref<1x128xf32, #tpu.memory_space<vmem>>, vector<1x128xf32>
    %c0_7 = arith.constant 0 : index
    %c0_8 = arith.constant 0 : index
    %4 = vector.load %arg9[%c0_7, %c0_8] : memref<1x128xf32, #tpu.memory_space<vmem>>, vector<1x128xf32>
    %c0_9 = arith.constant 0 : index
    %c0_10 = arith.constant 0 : index
    %5 = vector.load %arg10[%c0_9, %c0_10] : memref<256x256xf32, #tpu.memory_space<vmem>>, vector<256x256xf32>
    %cst = arith.constant dense<0.000000e+00> : vector<32x128xf32>
    %6 = tpu.matmul %1, %0, %cst {dimension_numbers = #tpu.dot_dimension_numbers<[1], [0], [0], [1], [0, 0, 1, 1], [], []>} : vector<32x32xf32>, vector<32x128xf32>, vector<32x128xf32> -> vector<32x128xf32>
    %cst_11 = arith.constant dense<0.000000e+00> : vector<32x128xf32>
    %7 = tpu.matmul %2, %0, %cst_11 {dimension_numbers = #tpu.dot_dimension_numbers<[1], [0], [0], [1], [0, 0, 1, 1], [], []>} : vector<32x32xf32>, vector<32x128xf32>, vector<32x128xf32> -> vector<32x128xf32>
    %8 = tpu.concatenate %6, %0, %7 in 1 : vector<32x128xf32>, vector<32x128xf32>, vector<32x128xf32> -> vector<32x384xf32>
    %c0_12 = arith.constant 0 : index
    %c0_13 = arith.constant 0 : index
    %9 = vector.load %arg4[%c0_12, %c0_13] : memref<384x128xf32, #tpu.memory_space<vmem>>, vector<384x128xf32>
    %cst_14 = arith.constant dense<0.000000e+00> : vector<32x128xf32>
    %10 = tpu.matmul %8, %9, %cst_14 {dimension_numbers = #tpu.dot_dimension_numbers<[1], [0], [0], [1], [0, 0, 1, 1], [], []>} : vector<32x384xf32>, vector<384x128xf32>, vector<32x128xf32> -> vector<32x128xf32>
    %c0_15 = arith.constant 0 : index
    %c0_16 = arith.constant 0 : index
    %11 = vector.load %arg5[%c0_15, %c0_16] : memref<1x128xf32, #tpu.memory_space<vmem>>, vector<1x128xf32>
    %12 = vector.broadcast %11 : vector<1x128xf32> to vector<32x128xf32>
    %13 = arith.addf %10, %12 : vector<32x128xf32>
    %14 = arith.mulf %13, %13 : vector<32x128xf32>
    %15 = tpu.concatenate %13, %14 in 1 : vector<32x128xf32>, vector<32x128xf32> -> vector<32x256xf32>
    %cst_17 = arith.constant dense<0.000000e+00> : vector<256xf32>
    %16 = vector.multi_reduction <add>, %15, %cst_17 [0] : vector<32x256xf32> to vector<256xf32>
    %17 = vector.shape_cast %16 : vector<256xf32> to vector<1x256xf32>
    %cst_18 = arith.constant dense<0.000000e+00> : vector<1x256xf32>
    %18 = tpu.matmul %17, %5, %cst_18 {dimension_numbers = #tpu.dot_dimension_numbers<[1], [0], [0], [1], [0, 0, 1, 1], [], []>} : vector<1x256xf32>, vector<256x256xf32>, vector<1x256xf32> -> vector<1x256xf32>
    %19 = vector.extract_strided_slice %18 {offsets = [0, 0], sizes = [1, 128], strides = [1, 1]} : vector<1x256xf32> to vector<1x128xf32>
    %20 = vector.extract_strided_slice %18 {offsets = [0, 128], sizes = [1, 128], strides = [1, 1]} : vector<1x256xf32> to vector<1x128xf32>
    %21 = arith.mulf %19, %19 : vector<1x128xf32>
    %22 = arith.subf %20, %21 : vector<1x128xf32>
    %cst_19 = arith.constant 0.000000e+00 : f32
    %23 = vector.broadcast %cst_19 : f32 to vector<1x128xf32>
    %24 = arith.maximumf %22, %23 : vector<1x128xf32>
    %cst_20 = arith.constant 9.99999974E-6 : f32
    %25 = vector.broadcast %cst_20 : f32 to vector<1x128xf32>
    %26 = arith.addf %24, %25 : vector<1x128xf32>
    %27 = math.rsqrt %26 : vector<1x128xf32>
    %28 = arith.mulf %3, %27 : vector<1x128xf32>
    %29 = arith.mulf %19, %28 : vector<1x128xf32>
    %30 = arith.subf %4, %29 : vector<1x128xf32>
    %31 = vector.broadcast %28 : vector<1x128xf32> to vector<32x128xf32>
    %32 = arith.mulf %13, %31 : vector<32x128xf32>
    %33 = vector.broadcast %30 : vector<1x128xf32> to vector<32x128xf32>
    %34 = arith.addf %32, %33 : vector<32x128xf32>
    %cst_21 = arith.constant 0.000000e+00 : f32
    %35 = vector.broadcast %cst_21 : f32 to vector<32x128xf32>
    %36 = arith.maximumf %34, %35 : vector<32x128xf32>
    %cst_22 = arith.constant dense<0.000000e+00> : vector<32x128xf32>
    %37 = tpu.matmul %1, %36, %cst_22 {dimension_numbers = #tpu.dot_dimension_numbers<[1], [0], [0], [1], [0, 0, 1, 1], [], []>} : vector<32x32xf32>, vector<32x128xf32>, vector<32x128xf32> -> vector<32x128xf32>
    %cst_23 = arith.constant dense<0.000000e+00> : vector<32x128xf32>
    %38 = tpu.matmul %2, %36, %cst_23 {dimension_numbers = #tpu.dot_dimension_numbers<[1], [0], [0], [1], [0, 0, 1, 1], [], []>} : vector<32x32xf32>, vector<32x128xf32>, vector<32x128xf32> -> vector<32x128xf32>
    %39 = tpu.concatenate %37, %36, %38 in 1 : vector<32x128xf32>, vector<32x128xf32>, vector<32x128xf32> -> vector<32x384xf32>
    %c0_24 = arith.constant 0 : index
    %c0_25 = arith.constant 0 : index
    %40 = vector.load %arg6[%c0_24, %c0_25] : memref<384x128xf32, #tpu.memory_space<vmem>>, vector<384x128xf32>
    %cst_26 = arith.constant dense<0.000000e+00> : vector<32x128xf32>
    %41 = tpu.matmul %39, %40, %cst_26 {dimension_numbers = #tpu.dot_dimension_numbers<[1], [0], [0], [1], [0, 0, 1, 1], [], []>} : vector<32x384xf32>, vector<384x128xf32>, vector<32x128xf32> -> vector<32x128xf32>
    %c0_27 = arith.constant 0 : index
    %c0_28 = arith.constant 0 : index
    %42 = vector.load %arg7[%c0_27, %c0_28] : memref<1x128xf32, #tpu.memory_space<vmem>>, vector<1x128xf32>
    %43 = vector.broadcast %42 : vector<1x128xf32> to vector<32x128xf32>
    %44 = arith.addf %41, %43 : vector<32x128xf32>
    %45 = arith.mulf %44, %44 : vector<32x128xf32>
    %46 = tpu.concatenate %44, %45 in 1 : vector<32x128xf32>, vector<32x128xf32> -> vector<32x256xf32>
    %cst_29 = arith.constant dense<0.000000e+00> : vector<256xf32>
    %47 = vector.multi_reduction <add>, %46, %cst_29 [0] : vector<32x256xf32> to vector<256xf32>
    %48 = vector.shape_cast %47 : vector<256xf32> to vector<1x256xf32>
    %cst_30 = arith.constant dense<0.000000e+00> : vector<1x256xf32>
    %49 = tpu.matmul %48, %5, %cst_30 {dimension_numbers = #tpu.dot_dimension_numbers<[1], [0], [0], [1], [0, 0, 1, 1], [], []>} : vector<1x256xf32>, vector<256x256xf32>, vector<1x256xf32> -> vector<1x256xf32>
    %50 = vector.extract_strided_slice %49 {offsets = [0, 0], sizes = [1, 128], strides = [1, 1]} : vector<1x256xf32> to vector<1x128xf32>
    %51 = vector.extract_strided_slice %49 {offsets = [0, 128], sizes = [1, 128], strides = [1, 1]} : vector<1x256xf32> to vector<1x128xf32>
    %52 = arith.mulf %50, %50 : vector<1x128xf32>
    %53 = arith.subf %51, %52 : vector<1x128xf32>
    %cst_31 = arith.constant 0.000000e+00 : f32
    %54 = vector.broadcast %cst_31 : f32 to vector<1x128xf32>
    %55 = arith.maximumf %53, %54 : vector<1x128xf32>
    %cst_32 = arith.constant 9.99999974E-6 : f32
    %56 = vector.broadcast %cst_32 : f32 to vector<1x128xf32>
    %57 = arith.addf %55, %56 : vector<1x128xf32>
    %58 = math.rsqrt %57 : vector<1x128xf32>
    %59 = arith.mulf %3, %58 : vector<1x128xf32>
    %60 = arith.mulf %50, %59 : vector<1x128xf32>
    %61 = arith.subf %4, %60 : vector<1x128xf32>
    %62 = vector.broadcast %59 : vector<1x128xf32> to vector<32x128xf32>
    %63 = arith.mulf %44, %62 : vector<32x128xf32>
    %64 = vector.broadcast %61 : vector<1x128xf32> to vector<32x128xf32>
    %65 = arith.addf %63, %64 : vector<32x128xf32>
    %66 = arith.addf %65, %0 : vector<32x128xf32>
    %c0_33 = arith.constant 0 : index
    %c0_34 = arith.constant 0 : index
    %67 = vector.load %arg11[%c0_33, %c0_34] : memref<32x128xf32, #tpu.memory_space<vmem>>, vector<32x128xf32>
    tpu.vector_store %arg11[%c0_33, %c0_34], %66 {strides = array<i32>} : memref<32x128xf32, #tpu.memory_space<vmem>>, vector<32x128xf32>,
    return
  }
  func.func @transform_0(%arg0: i32) -> (i32, i32) {
    %c0_i32 = arith.constant 0 : i32
    %c0_i32_0 = arith.constant 0 : i32
    %c0_i32_1 = arith.constant 0 : i32
    return %c0_i32, %c0_i32_0 : i32, i32
  }
  func.func @transform_1(%arg0: i32) -> (i32, i32) {
    %c0_i32 = arith.constant 0 : i32
    %c0_i32_0 = arith.constant 0 : i32
    %c0_i32_1 = arith.constant 0 : i32
    return %c0_i32, %c0_i32_0 : i32, i32
  }
  func.func @transform_2(%arg0: i32) -> (i32, i32) {
    %c0_i32 = arith.constant 0 : i32
    %c0_i32_0 = arith.constant 0 : i32
    %c0_i32_1 = arith.constant 0 : i32
    return %c0_i32, %c0_i32_0 : i32, i32
  }
  func.func @transform_3(%arg0: i32) -> (i32, i32) {
    %c0_i32 = arith.constant 0 : i32
    %c0_i32_0 = arith.constant 0 : i32
    %c0_i32_1 = arith.constant 0 : i32
    return %c0_i32, %c0_i32_0 : i32, i32
  }
  func.func @transform_4(%arg0: i32) -> (i32, i32) {
    %c0_i32 = arith.constant 0 : i32
    %c0_i32_0 = arith.constant 0 : i32
    %c0_i32_1 = arith.constant 0 : i32
    return %c0_i32, %c0_i32_0 : i32, i32
  }
  func.func @transform_5(%arg0: i32) -> (i32, i32) {
    %c0_i32 = arith.constant 0 : i32
    %c0_i32_0 = arith.constant 0 : i32
    %c0_i32_1 = arith.constant 0 : i32
    return %c0_i32, %c0_i32_0 : i32, i32
  }
  func.func @transform_6(%arg0: i32) -> (i32, i32) {
    %c0_i32 = arith.constant 0 : i32
    %c0_i32_0 = arith.constant 0 : i32
    %c0_i32_1 = arith.constant 0 : i32
    return %c0_i32, %c0_i32_0 : i32, i32
  }
  func.func @transform_7(%arg0: i32) -> (i32, i32) {
    %c0_i32 = arith.constant 0 : i32
    %c0_i32_0 = arith.constant 0 : i32
    %c0_i32_1 = arith.constant 0 : i32
    return %c0_i32, %c0_i32_0 : i32, i32
  }
  func.func @transform_8(%arg0: i32) -> (i32, i32) {
    %c0_i32 = arith.constant 0 : i32
    %c0_i32_0 = arith.constant 0 : i32
    %c0_i32_1 = arith.constant 0 : i32
    return %c0_i32, %c0_i32_0 : i32, i32
  }
  func.func @transform_9(%arg0: i32) -> (i32, i32) {
    %c0_i32 = arith.constant 0 : i32
    %c0_i32_0 = arith.constant 0 : i32
    %c0_i32_1 = arith.constant 0 : i32
    return %c0_i32, %c0_i32_0 : i32, i32
  }
  func.func @transform_10(%arg0: i32) -> (i32, i32) {
    %c0_i32 = arith.constant 0 : i32
    %c0_i32_0 = arith.constant 0 : i32
    %c0_i32_1 = arith.constant 0 : i32
    return %c0_i32, %c0_i32_0 : i32, i32
  }
}

</mosaic_0001>

<llo_original>
// kernel: resnet_block_apply.1
$region0: #{resnet_block_apply.1}
  #allocation0 [shape = 'u32[]', space=smem, size = 0x4, offset = 0x4, fixed_abs, tag = 'smem constant byte address 0x4 - core index']
  #allocation1 [shape = 'u32[144,128]{1,0:T(1,128)}', space=vmem, size = 0x12000, scoped, tag = 'internal scratch']
  %s0 = inlined_call_operand.vmem [shape: f32[32,128], index: 0, kind: input, shape index: {}]
  %s1 = inlined_call_operand.vmem [shape: f32[32,32], index: 1, kind: input, shape index: {}]
  %s2 = inlined_call_operand.vmem [shape: f32[32,32], index: 2, kind: input, shape index: {}]
  %s3 = inlined_call_operand.vmem [shape: f32[384,128], index: 3, kind: input, shape index: {}]
  %s4 = inlined_call_operand.vmem [shape: f32[1,128], index: 4, kind: input, shape index: {}]
  %s5 = inlined_call_operand.hbm [shape: f32[384,128], index: 5, kind: input, shape index: {}]
  %s6 = inlined_call_operand.vmem [shape: f32[1,128], index: 6, kind: input, shape index: {}]
  %s7 = inlined_call_operand.vmem [shape: f32[1,128], index: 7, kind: input, shape index: {}]
  %s8 = inlined_call_operand.vmem [shape: f32[1,128], index: 8, kind: input, shape index: {}]
  %s9 = inlined_call_operand.vmem [shape: f32[256,256], index: 9, kind: input, shape index: {}]
  %s10 = inlined_call_operand.vmem [shape: f32[32,128], index: 10, kind: output, shape index: {}]
  %s11 = sld [smem:[#allocation0]]
  $region54: #{resnet_block_apply.1} parent=0
    _
  %s13 = ssub.s32 1, %s11
  %s14 = scalar_select 0, %s13, %s11
  $region1: #{resnet_block_apply.1} parent=0
    #allocation2 [shape = 'u8[196608]{0}', space=vmem, size = 0x30000, scoped, tag = 'input window, operand 5, single buffered']
    #allocation3 [shape = 's32[1]{0}', space=sflag, size = 0x4, scoped, tag = 'scoped memory for resnet_block_apply.1']
    %15 = vsyncpa [#allocation3], 0
    // Predicated region
    $region2: #{resnet_block_apply.1} parent=1 // pred_check
      _
    $region3: #{resnet_block_apply.1} parent=1 // pred_check_branch
      %17 = sbr.rel (0) target = $region5
    $region4: #{resnet_block_apply.1} parent=1 // pred_region
      _
    $region5: #{resnet_block_apply.1} parent=1 // pred_fallthru
      _
    // Predicated region
    $region6: #{resnet_block_apply.1} parent=1 // pred_check
      _
    $region7: #{resnet_block_apply.1} parent=1 // pred_check_branch
      %19 = sbr.rel (0) target = $region9
    $region8: #{resnet_block_apply.1} parent=1 // pred_region
      _
    $region9: #{resnet_block_apply.1} parent=1 // pred_fallthru
      _
    // Predicated region
    $region10: #{resnet_block_apply.1} parent=1 // pred_check
      _
    $region11: #{resnet_block_apply.1} parent=1 // pred_check_branch
      %21 = sbr.rel (0) target = $region13
    $region12: #{resnet_block_apply.1} parent=1 // pred_region
      _
    $region13: #{resnet_block_apply.1} parent=1 // pred_fallthru
      _
    // Predicated region
    $region14: #{resnet_block_apply.1} parent=1 // pred_check
      _
    $region15: #{resnet_block_apply.1} parent=1 // pred_check_branch
      %23 = sbr.rel (0) target = $region17
    $region16: #{resnet_block_apply.1} parent=1 // pred_region
      _
    $region17: #{resnet_block_apply.1} parent=1 // pred_fallthru
      _
    // Predicated region
    $region18: #{resnet_block_apply.1} parent=1 // pred_check
      _
    $region19: #{resnet_block_apply.1} parent=1 // pred_check_branch
      %25 = sbr.rel (0) target = $region21
    $region20: #{resnet_block_apply.1} parent=1 // pred_region
      _
    $region21: #{resnet_block_apply.1} parent=1 // pred_fallthru
      _
    // Predicated region
    $region22: #{resnet_block_apply.1} parent=1 // pred_check
      _
    $region23: #{resnet_block_apply.1} parent=1 // pred_check_branch
      %27 = sbr.rel (0) target = $region25
    $region24: #{resnet_block_apply.1} parent=1 // pred_region
      %s29 = ssub.s32 6144, 6144
      %30 = vsyncadd [#allocation3], %s29
      %s31 = sshll.u32 [#allocation2], 4
      %s32 = int_to_ptr.vmem [resolvable:$true] %s31
      %37 = dma.hbm_to_vmem [thread:$0]  %s5, 6144, %s32, [#allocation3], 128, 128, 8
    $region25: #{resnet_block_apply.1} parent=1 // pred_fallthru
      _
    // Predicated region
    $region26: #{resnet_block_apply.1} parent=1 // pred_check
      _
    $region27: #{resnet_block_apply.1} parent=1 // pred_check_branch
      %39 = sbr.rel (0) target = $region29
    $region28: #{resnet_block_apply.1} parent=1 // pred_region
      _
    $region29: #{resnet_block_apply.1} parent=1 // pred_fallthru
      _
    // Predicated region
    $region30: #{resnet_block_apply.1} parent=1 // pred_check
      _
    $region31: #{resnet_block_apply.1} parent=1 // pred_check_branch
      %41 = sbr.rel (0) target = $region33
    $region32: #{resnet_block_apply.1} parent=1 // pred_region
      _
    $region33: #{resnet_block_apply.1} parent=1 // pred_fallthru
      _
    // Predicated region
    $region34: #{resnet_block_apply.1} parent=1 // pred_check
      _
    $region35: #{resnet_block_apply.1} parent=1 // pred_check_branch
      %43 = sbr.rel (0) target = $region37
    $region36: #{resnet_block_apply.1} parent=1 // pred_region
      _
    $region37: #{resnet_block_apply.1} parent=1 // pred_fallthru
      _
    // Predicated region
    $region38: #{resnet_block_apply.1} parent=1 // pred_check
      _
    $region39: #{resnet_block_apply.1} parent=1 // pred_check_branch
      %45 = sbr.rel (0) target = $region41
    $region40: #{resnet_block_apply.1} parent=1 // pred_region
      _
    $region41: #{resnet_block_apply.1} parent=1 // pred_fallthru
      _
    // Predicated region
    $region42: #{resnet_block_apply.1} parent=1 // pred_check
      _
    $region43: #{resnet_block_apply.1} parent=1 // pred_check_branch
      %47 = sbr.rel (0) target = $region45
    $region44: #{resnet_block_apply.1} parent=1 // pred_region
      %48 = dma.done [#allocation3], 6144
    $region45: #{resnet_block_apply.1} parent=1 // pred_fallthru
      _
    %v49 = vld [vmem:[%s0] sm:$0xff]
    %v50 = vld [vmem:[%s0 + $0x8] sm:$0xff]
    %v51 = vld [vmem:[%s0 + $0x10] sm:$0xff]
    %v52 = vld [vmem:[%s0 + $0x18] sm:$0xff]
    %v53 = vld [vmem:[%s1] sm:$0xff]
    %v54 = vld [vmem:[%s1 + $0x8] sm:$0xff]
    %v55 = vld [vmem:[%s1 + $0x10] sm:$0xff]
    %v56 = vld [vmem:[%s1 + $0x18] sm:$0xff]
    %v57 = vld [vmem:[%s2] sm:$0xff]
    %v58 = vld [vmem:[%s2 + $0x8] sm:$0xff]
    %v59 = vld [vmem:[%s2 + $0x10] sm:$0xff]
    %v60 = vld [vmem:[%s2 + $0x18] sm:$0xff]
    %v61 = vld [vmem:[%s7] sm:$0x1]
    %v62 = vld [vmem:[%s8] sm:$0x1]
    %v63 = vld [vmem:[%s9] sm:$0xff]
    %v64 = vld [vmem:[%s9 + $0x8] sm:$0xff]
    %v65 = vld [vmem:[%s9 + $0x10] sm:$0xff]
    %v66 = vld [vmem:[%s9 + $0x18] sm:$0xff]
    %v67 = vld [vmem:[%s9 + $0x20] sm:$0xff]
    %v68 = vld [vmem:[%s9 + $0x28] sm:$0xff]
    %v69 = vld [vmem:[%s9 + $0x30] sm:$0xff]
    %v70 = vld [vmem:[%s9 + $0x38] sm:$0xff]
    %v71 = vld [vmem:[%s9 + $0x40] sm:$0xff]
    %v72 = vld [vmem:[%s9 + $0x48] sm:$0xff]
    %v73 = vld [vmem:[%s9 + $0x50] sm:$0xff]
    %v74 = vld [vmem:[%s9 + $0x58] sm:$0xff]
    %v75 = vld [vmem:[%s9 + $0x60] sm:$0xff]
    %v76 = vld [vmem:[%s9 + $0x68] sm:$0xff]
    %v77 = vld [vmem:[%s9 + $0x70] sm:$0xff]
    %v78 = vld [vmem:[%s9 + $0x78] sm:$0xff]
    %v79 = vld [vmem:[%s9 + $0x80] sm:$0xff]
    %v80 = vld [vmem:[%s9 + $0x88] sm:$0xff]
    %v81 = vld [vmem:[%s9 + $0x90] sm:$0xff]
    %v82 = vld [vmem:[%s9 + $0x98] sm:$0xff]
    %v83 = vld [vmem:[%s9 + $0xa0] sm:$0xff]
    %v84 = vld [vmem:[%s9 + $0xa8] sm:$0xff]
    %v85 = vld [vmem:[%s9 + $0xb0] sm:$0xff]
    %v86 = vld [vmem:[%s9 + $0xb8] sm:$0xff]
    %v87 = vld [vmem:[%s9 + $0xc0] sm:$0xff]
    %v88 = vld [vmem:[%s9 + $0xc8] sm:$0xff]
    %v89 = vld [vmem:[%s9 + $0xd0] sm:$0xff]
    %v90 = vld [vmem:[%s9 + $0xd8] sm:$0xff]
    %v91 = vld [vmem:[%s9 + $0xe0] sm:$0xff]
    %v92 = vld [vmem:[%s9 + $0xe8] sm:$0xff]
    %v93 = vld [vmem:[%s9 + $0xf0] sm:$0xff]
    %v94 = vld [vmem:[%s9 + $0xf8] sm:$0xff]
    %v95 = vld [vmem:[%s9 + $0x100] sm:$0xff]
    %v96 = vld [vmem:[%s9 + $0x108] sm:$0xff]
    %v97 = vld [vmem:[%s9 + $0x110] sm:$0xff]
    %v98 = vld [vmem:[%s9 + $0x118] sm:$0xff]
    %v99 = vld [vmem:[%s9 + $0x120] sm:$0xff]
    %v100 = vld [vmem:[%s9 + $0x128] sm:$0xff]
    %v101 = vld [vmem:[%s9 + $0x130] sm:$0xff]
    %v102 = vld [vmem:[%s9 + $0x138] sm:$0xff]
    %v103 = vld [vmem:[%s9 + $0x140] sm:$0xff]
    %v104 = vld [vmem:[%s9 + $0x148] sm:$0xff]
    %v105 = vld [vmem:[%s9 + $0x150] sm:$0xff]
    %v106 = vld [vmem:[%s9 + $0x158] sm:$0xff]
    %v107 = vld [vmem:[%s9 + $0x160] sm:$0xff]
    %v108 = vld [vmem:[%s9 + $0x168] sm:$0xff]
    %v109 = vld [vmem:[%s9 + $0x170] sm:$0xff]
    %v110 = vld [vmem:[%s9 + $0x178] sm:$0xff]
    %v111 = vld [vmem:[%s9 + $0x180] sm:$0xff]
    %v112 = vld [vmem:[%s9 + $0x188] sm:$0xff]
    %v113 = vld [vmem:[%s9 + $0x190] sm:$0xff]
    %v114 = vld [vmem:[%s9 + $0x198] sm:$0xff]
    %v115 = vld [vmem:[%s9 + $0x1a0] sm:$0xff]
    %v116 = vld [vmem:[%s9 + $0x1a8] sm:$0xff]
    %v117 = vld [vmem:[%s9 + $0x1b0] sm:$0xff]
    %v118 = vld [vmem:[%s9 + $0x1b8] sm:$0xff]
    %v119 = vld [vmem:[%s9 + $0x1c0] sm:$0xff]
    %v120 = vld [vmem:[%s9 + $0x1c8] sm:$0xff]
    %v121 = vld [vmem:[%s9 + $0x1d0] sm:$0xff]
    %v122 = vld [vmem:[%s9 + $0x1d8] sm:$0xff]
    %v123 = vld [vmem:[%s9 + $0x1e0] sm:$0xff]
    %v124 = vld [vmem:[%s9 + $0x1e8] sm:$0xff]
    %v125 = vld [vmem:[%s9 + $0x1f0] sm:$0xff]
    %v126 = vld [vmem:[%s9 + $0x1f8] sm:$0xff]
    %vm127 = vcmask 261120
    %v129 = vsel %vm127, %v53, 0
    %v132 = vsel %vm127, %v54, 0
    %v135 = vsel %vm127, %v55, 0
    %v138 = vsel %vm127, %v56, 0
    %140 = vmatprep.subr.mxu0 0.0
    %141 = vmatpush1.msra.mxu0 %v49
    %142 = vmatprep.subr.mxu0 0.0
    %143 = vmatpush1.msra.mxu0 %v50
    %144 = vmatprep.subr.mxu0 0.0
    %145 = vmatpush1.msra.mxu0 %v51
    %146 = vmatprep.subr.mxu0 0.0
    %147 = vmatpush1.msra.mxu0 %v52
    %148 = vmatprep.subr.mxu0 0.0
    %149 = vmatpush1.msra.mxu0 0.0
    %150 = vmatprep.subr.mxu0 0.0
    %151 = vmatpush1.msra.mxu0 0.0
    %152 = vmatprep.subr.mxu0 0.0
    %153 = vmatpush1.msra.mxu0 0.0
    %154 = vmatprep.subr.mxu0 0.0
    %155 = vmatpush1.msra.mxu0 0.0
    %156 = vmatprep.subr.mxu0 0.0
    %157 = vmatpush1.msra.mxu0 0.0
    %158 = vmatprep.subr.mxu0 0.0
    %159 = vmatpush1.msra.mxu0 0.0
    %160 = vmatprep.subr.mxu0 0.0
    %161 = vmatpush1.msra.mxu0 0.0
    %162 = vmatprep.subr.mxu0 0.0
    %163 = vmatpush1.msra.mxu0 0.0
    %164 = vmatprep.subr.mxu0 0.0
    %165 = vmatpush1.msra.mxu0 0.0
    %166 = vmatprep.subr.mxu0 0.0
    %167 = vmatpush1.msra.mxu0 0.0
    %168 = vmatprep.subr.mxu0 0.0
    %169 = vmatpush1.msra.mxu0 0.0
    %170 = vmatprep.subr.mxu0 0.0
    %171 = vmatpush1.msra.mxu0 0.0
    %172 = vmatprep.subr.mxu0 0.0
    %173 = vmatpush1.msra.mxu0 0.0
    %174 = vmatprep.subr.mxu0 0.0
    %175 = vmatpush1.msra.mxu0 0.0
    %176 = vmatprep.subr.mxu0 0.0
    %177 = vmatpush1.msra.mxu0 0.0
    %178 = vmatprep.subr.mxu0 0.0
    %179 = vmatpush1.msra.mxu0 0.0
    %180 = vmatprep.subr.mxu0 0.0
    %181 = vmatpush1.msra.mxu0 0.0
    %182 = vmatprep.subr.mxu0 0.0
    %183 = vmatpush1.msra.mxu0 0.0
    %184 = vmatprep.subr.mxu0 0.0
    %185 = vmatpush1.msra.mxu0 0.0
    %186 = vmatprep.subr.mxu0 0.0
    %187 = vmatpush1.msra.mxu0 0.0
    %188 = vmatprep.subr.mxu0 0.0
    %189 = vmatpush1.msra.mxu0 0.0
    %190 = vmatprep.subr.mxu0 0.0
    %191 = vmatpush1.msra.mxu0 0.0
    %192 = vmatprep.subr.mxu0 0.0
    %193 = vmatpush1.msra.mxu0 0.0
    %194 = vmatprep.subr.mxu0 0.0
    %195 = vmatpush1.msra.mxu0 0.0
    %196 = vmatprep.subr.mxu0 0.0
    %197 = vmatpush1.msra.mxu0 0.0
    %198 = vmatprep.subr.mxu0 0.0
    %199 = vmatpush1.msra.mxu0 0.0
    %200 = vmatprep.subr.mxu0 0.0
    %201 = vmatpush1.msra.mxu0 0.0
    %202 = vmatprep.subr.mxu0 0.0
    %203 = vmatpush1.msra.mxu0 0.0
    %204 = vmatprep.mubr.f32.mxu0 0.0
    %205 = vmatmul.mubr.f32.gmra.mrb[0].mxu0 %v129
    %v206 = vpop.f32.mrb[0].mxu0
    %v207 = vadd.f32 0.0, %v206
    %v208 = vpop.f32.mrb[0].mxu0
    %209 = vmatprep.mubr.f32.mxu0 0.0
    %210 = vmatmul.mubr.f32.gmra.mrb[0].mxu0 %v132
    %v211 = vpop.f32.mrb[0].mxu0
    %v212 = vadd.f32 0.0, %v211
    %v213 = vpop.f32.mrb[0].mxu0
    %214 = vmatprep.mubr.f32.mxu0 0.0
    %215 = vmatmul.mubr.f32.gmra.mrb[0].mxu0 %v135
    %v216 = vpop.f32.mrb[0].mxu0
    %v217 = vadd.f32 0.0, %v216
    %v218 = vpop.f32.mrb[0].mxu0
    %219 = vmatprep.mubr.f32.mxu0 0.0
    %220 = vmatmul.mubr.f32.gmra.mrb[0].mxu0 %v138
    %v221 = vpop.f32.mrb[0].mxu0
    %v222 = vadd.f32 0.0, %v221
    %v223 = vpop.f32.mrb[0].mxu0
    %224 = vdwg.mxu0
    %v226 = vsel %vm127, %v57, 0
    %v229 = vsel %vm127, %v58, 0
    %v232 = vsel %vm127, %v59, 0
    %v235 = vsel %vm127, %v60, 0
    %237 = vmatprep.subr.mxu0 0.0
    %238 = vmatpush1.msra.mxu0 %v49
    %239 = vmatprep.subr.mxu0 0.0
    %240 = vmatpush1.msra.mxu0 %v50
    %241 = vmatprep.subr.mxu0 0.0
    %242 = vmatpush1.msra.mxu0 %v51
    %243 = vmatprep.subr.mxu0 0.0
    %244 = vmatpush1.msra.mxu0 %v52
    %245 = vmatprep.subr.mxu0 0.0
    %246 = vmatpush1.msra.mxu0 0.0
    %247 = vmatprep.subr.mxu0 0.0
    %248 = vmatpush1.msra.mxu0 0.0
    %249 = vmatprep.subr.mxu0 0.0
    %250 = vmatpush1.msra.mxu0 0.0
    %251 = vmatprep.subr.mxu0 0.0
    %252 = vmatpush1.msra.mxu0 0.0
    %253 = vmatprep.subr.mxu0 0.0
    %254 = vmatpush1.msra.mxu0 0.0
    %255 = vmatprep.subr.mxu0 0.0
    %256 = vmatpush1.msra.mxu0 0.0
    %257 = vmatprep.subr.mxu0 0.0
    %258 = vmatpush1.msra.mxu0 0.0
    %259 = vmatprep.subr.mxu0 0.0
    %260 = vmatpush1.msra.mxu0 0.0
    %261 = vmatprep.subr.mxu0 0.0
    %262 = vmatpush1.msra.mxu0 0.0
    %263 = vmatprep.subr.mxu0 0.0
    %264 = vmatpush1.msra.mxu0 0.0
    %265 = vmatprep.subr.mxu0 0.0
    %266 = vmatpush1.msra.mxu0 0.0
    %267 = vmatprep.subr.mxu0 0.0
    %268 = vmatpush1.msra.mxu0 0.0
    %269 = vmatprep.subr.mxu0 0.0
    %270 = vmatpush1.msra.mxu0 0.0
    %271 = vmatprep.subr.mxu0 0.0
    %272 = vmatpush1.msra.mxu0 0.0
    %273 = vmatprep.subr.mxu0 0.0
    %274 = vmatpush1.msra.mxu0 0.0
    %275 = vmatprep.subr.mxu0 0.0
    %276 = vmatpush1.msra.mxu0 0.0
    %277 = vmatprep.subr.mxu0 0.0
    %278 = vmatpush1.msra.mxu0 0.0
    %279 = vmatprep.subr.mxu0 0.0
    %280 = vmatpush1.msra.mxu0 0.0
    %281 = vmatprep.subr.mxu0 0.0
    %282 = vmatpush1.msra.mxu0 0.0
    %283 = vmatprep.subr.mxu0 0.0
    %284 = vmatpush1.msra.mxu0 0.0
    %285 = vmatprep.subr.mxu0 0.0
    %286 = vmatpush1.msra.mxu0 0.0
    %287 = vmatprep.subr.mxu0 0.0
    %288 = vmatpush1.msra.mxu0 0.0
    %289 = vmatprep.subr.mxu0 0.0
    %290 = vmatpush1.msra.mxu0 0.0
    %291 = vmatprep.subr.mxu0 0.0
    %292 = vmatpush1.msra.mxu0 0.0
    %293 = vmatprep.subr.mxu0 0.0
    %294 = vmatpush1.msra.mxu0 0.0
    %295 = vmatprep.subr.mxu0 0.0
    %296 = vmatpush1.msra.mxu0 0.0
    %297 = vmatprep.subr.mxu0 0.0
    %298 = vmatpush1.msra.mxu0 0.0
    %299 = vmatprep.subr.mxu0 0.0
    %300 = vmatpush1.msra.mxu0 0.0
    %301 = vmatprep.mubr.f32.mxu0 0.0
    %302 = vmatmul.mubr.f32.gmra.mrb[0].mxu0 %v226
    %v303 = vpop.f32.mrb[0].mxu0
    %v304 = vadd.f32 0.0, %v303
    %v305 = vpop.f32.mrb[0].mxu0
    %306 = vmatprep.mubr.f32.mxu0 0.0
    %307 = vmatmul.mubr.f32.gmra.mrb[0].mxu0 %v229
    %v308 = vpop.f32.mrb[0].mxu0
    %v309 = vadd.f32 0.0, %v308
    %v310 = vpop.f32.mrb[0].mxu0
    %311 = vmatprep.mubr.f32.mxu0 0.0
    %312 = vmatmul.mubr.f32.gmra.mrb[0].mxu0 %v232
    %v313 = vpop.f32.mrb[0].mxu0
    %v314 = vadd.f32 0.0, %v313
    %v315 = vpop.f32.mrb[0].mxu0
    %316 = vmatprep.mubr.f32.mxu0 0.0
    %317 = vmatmul.mubr.f32.gmra.mrb[0].mxu0 %v235
    %v318 = vpop.f32.mrb[0].mxu0
    %v319 = vadd.f32 0.0, %v318
    %v320 = vpop.f32.mrb[0].mxu0
    %321 = vdwg.mxu0
    %v322 = vld [vmem:[%s3] sm:$0xff]
    %v323 = vld [vmem:[%s3 + $0x8] sm:$0xff]
    %v324 = vld [vmem:[%s3 + $0x10] sm:$0xff]
    %v325 = vld [vmem:[%s3 + $0x18] sm:$0xff]
    %v326 = vld [vmem:[%s3 + $0x20] sm:$0xff]
    %v327 = vld [vmem:[%s3 + $0x28] sm:$0xff]
    %v328 = vld [vmem:[%s3 + $0x30] sm:$0xff]
    %v329 = vld [vmem:[%s3 + $0x38] sm:$0xff]
    %v330 = vld [vmem:[%s3 + $0x40] sm:$0xff]
    %v331 = vld [vmem:[%s3 + $0x48] sm:$0xff]
    %v332 = vld [vmem:[%s3 + $0x50] sm:$0xff]
    %v333 = vld [vmem:[%s3 + $0x58] sm:$0xff]
    %v334 = vld [vmem:[%s3 + $0x60] sm:$0xff]
    %v335 = vld [vmem:[%s3 + $0x68] sm:$0xff]
    %v336 = vld [vmem:[%s3 + $0x70] sm:$0xff]
    %v337 = vld [vmem:[%s3 + $0x78] sm:$0xff]
    %v338 = vld [vmem:[%s3 + $0x80] sm:$0xff]
    %v339 = vld [vmem:[%s3 + $0x88] sm:$0xff]
    %v340 = vld [vmem:[%s3 + $0x90] sm:$0xff]
    %v341 = vld [vmem:[%s3 + $0x98] sm:$0xff]
    %v342 = vld [vmem:[%s3 + $0xa0] sm:$0xff]
    %v343 = vld [vmem:[%s3 + $0xa8] sm:$0xff]
    %v344 = vld [vmem:[%s3 + $0xb0] sm:$0xff]
    %v345 = vld [vmem:[%s3 + $0xb8] sm:$0xff]
    %v346 = vld [vmem:[%s3 + $0xc0] sm:$0xff]
    %v347 = vld [vmem:[%s3 + $0xc8] sm:$0xff]
    %v348 = vld [vmem:[%s3 + $0xd0] sm:$0xff]
    %v349 = vld [vmem:[%s3 + $0xd8] sm:$0xff]
    %v350 = vld [vmem:[%s3 + $0xe0] sm:$0xff]
    %v351 = vld [vmem:[%s3 + $0xe8] sm:$0xff]
    %v352 = vld [vmem:[%s3 + $0xf0] sm:$0xff]
    %v353 = vld [vmem:[%s3 + $0xf8] sm:$0xff]
    %v354 = vld [vmem:[%s3 + $0x100] sm:$0xff]
    %v355 = vld [vmem:[%s3 + $0x108] sm:$0xff]
    %v356 = vld [vmem:[%s3 + $0x110] sm:$0xff]
    %v357 = vld [vmem:[%s3 + $0x118] sm:$0xff]
    %v358 = vld [vmem:[%s3 + $0x120] sm:$0xff]
    %v359 = vld [vmem:[%s3 + $0x128] sm:$0xff]
    %v360 = vld [vmem:[%s3 + $0x130] sm:$0xff]
    %v361 = vld [vmem:[%s3 + $0x138] sm:$0xff]
    %v362 = vld [vmem:[%s3 + $0x140] sm:$0xff]
    %v363 = vld [vmem:[%s3 + $0x148] sm:$0xff]
    %v364 = vld [vmem:[%s3 + $0x150] sm:$0xff]
    %v365 = vld [vmem:[%s3 + $0x158] sm:$0xff]
    %v366 = vld [vmem:[%s3 + $0x160] sm:$0xff]
    %v367 = vld [vmem:[%s3 + $0x168] sm:$0xff]
    %v368 = vld [vmem:[%s3 + $0x170] sm:$0xff]
    %v369 = vld [vmem:[%s3 + $0x178] sm:$0xff]
    %v370 = vld [vmem:[%s4] sm:$0x1]
    %v372 = vlaneseq
    %v373 = vshrl.u32 %v372, 7
    %v374 = vsub.s32 0, %v373
    %v375 = vrot.slane %v370, %v374
    %377 = vmatprep.subr.mxu0 0.0
    %378 = vmatpush1.msra.mxu0 %v322
    %379 = vmatprep.subr.mxu0 0.0
    %380 = vmatpush1.msra.mxu0 %v323
    %381 = vmatprep.subr.mxu0 0.0
    %382 = vmatpush1.msra.mxu0 %v324
    %383 = vmatprep.subr.mxu0 0.0
    %384 = vmatpush1.msra.mxu0 %v325
    %385 = vmatprep.subr.mxu0 0.0
    %386 = vmatpush1.msra.mxu0 %v326
    %387 = vmatprep.subr.mxu0 0.0
    %388 = vmatpush1.msra.mxu0 %v327
    %389 = vmatprep.subr.mxu0 0.0
    %390 = vmatpush1.msra.mxu0 %v328
    %391 = vmatprep.subr.mxu0 0.0
    %392 = vmatpush1.msra.mxu0 %v329
    %393 = vmatprep.subr.mxu0 0.0
    %394 = vmatpush1.msra.mxu0 %v330
    %395 = vmatprep.subr.mxu0 0.0
    %396 = vmatpush1.msra.mxu0 %v331
    %397 = vmatprep.subr.mxu0 0.0
    %398 = vmatpush1.msra.mxu0 %v332
    %399 = vmatprep.subr.mxu0 0.0
    %400 = vmatpush1.msra.mxu0 %v333
    %401 = vmatprep.subr.mxu0 0.0
    %402 = vmatpush1.msra.mxu0 %v334
    %403 = vmatprep.subr.mxu0 0.0
    %404 = vmatpush1.msra.mxu0 %v335
    %405 = vmatprep.subr.mxu0 0.0
    %406 = vmatpush1.msra.mxu0 %v336
    %407 = vmatprep.subr.mxu0 0.0
    %408 = vmatpush1.msra.mxu0 %v337
    %409 = vmatprep.subr.mxu0 0.0
    %410 = vmatpush1.msra.mxu0 %v338
    %411 = vmatprep.subr.mxu0 0.0
    %412 = vmatpush1.msra.mxu0 %v339
    %413 = vmatprep.subr.mxu0 0.0
    %414 = vmatpush1.msra.mxu0 %v340
    %415 = vmatprep.subr.mxu0 0.0
    %416 = vmatpush1.msra.mxu0 %v341
    %417 = vmatprep.subr.mxu0 0.0
    %418 = vmatpush1.msra.mxu0 %v342
    %419 = vmatprep.subr.mxu0 0.0
    %420 = vmatpush1.msra.mxu0 %v343
    %421 = vmatprep.subr.mxu0 0.0
    %422 = vmatpush1.msra.mxu0 %v344
    %423 = vmatprep.subr.mxu0 0.0
    %424 = vmatpush1.msra.mxu0 %v345
    %425 = vmatprep.subr.mxu0 0.0
    %426 = vmatpush1.msra.mxu0 %v346
    %427 = vmatprep.subr.mxu0 0.0
    %428 = vmatpush1.msra.mxu0 %v347
    %429 = vmatprep.subr.mxu0 0.0
    %430 = vmatpush1.msra.mxu0 %v348
    %431 = vmatprep.subr.mxu0 0.0
    %432 = vmatpush1.msra.mxu0 %v349
    %433 = vmatprep.subr.mxu0 0.0
    %434 = vmatpush1.msra.mxu0 %v350
    %435 = vmatprep.subr.mxu0 0.0
    %436 = vmatpush1.msra.mxu0 %v351
    %437 = vmatprep.subr.mxu0 0.0
    %438 = vmatpush1.msra.mxu0 %v352
    %439 = vmatprep.subr.mxu0 0.0
    %440 = vmatpush1.msra.mxu0 %v353
    %441 = vmatprep.mubr.f32.mxu0 %v49
    %442 = vmatmul.mubr.f32.gmra.mrb[0].mxu0 %v207
    %v443 = vpop.f32.mrb[0].mxu0
    %v444 = vadd.f32 %v375, %v443
    %v445 = vpop.f32.mrb[0].mxu0
    %446 = vmatprep.mubr.f32.mxu0 %v50
    %447 = vmatmul.mubr.f32.gmra.mrb[0].mxu0 %v212
    %v448 = vpop.f32.mrb[0].mxu0
    %v449 = vadd.f32 %v375, %v448
    %v450 = vpop.f32.mrb[0].mxu0
    %451 = vmatprep.mubr.f32.mxu0 %v51
    %452 = vmatmul.mubr.f32.gmra.mrb[0].mxu0 %v217
    %v453 = vpop.f32.mrb[0].mxu0
    %v454 = vadd.f32 %v375, %v453
    %v455 = vpop.f32.mrb[0].mxu0
    %456 = vmatprep.mubr.f32.mxu0 %v52
    %457 = vmatmul.mubr.f32.gmra.mrb[0].mxu0 %v222
    %v458 = vpop.f32.mrb[0].mxu0
    %v459 = vadd.f32 %v375, %v458
    %v460 = vpop.f32.mrb[0].mxu0
    %461 = vdwg.mxu0
    %462 = vmatprep.subr.mxu0 0.0
    %463 = vmatpush1.msra.mxu0 %v354
    %464 = vmatprep.subr.mxu0 0.0
    %465 = vmatpush1.msra.mxu0 %v355
    %466 = vmatprep.subr.mxu0 0.0
    %467 = vmatpush1.msra.mxu0 %v356
    %468 = vmatprep.subr.mxu0 0.0
    %469 = vmatpush1.msra.mxu0 %v357
    %470 = vmatprep.subr.mxu0 0.0
    %471 = vmatpush1.msra.mxu0 %v358
    %472 = vmatprep.subr.mxu0 0.0
    %473 = vmatpush1.msra.mxu0 %v359
    %474 = vmatprep.subr.mxu0 0.0
    %475 = vmatpush1.msra.mxu0 %v360
    %476 = vmatprep.subr.mxu0 0.0
    %477 = vmatpush1.msra.mxu0 %v361
    %478 = vmatprep.subr.mxu0 0.0
    %479 = vmatpush1.msra.mxu0 %v362
    %480 = vmatprep.subr.mxu0 0.0
    %481 = vmatpush1.msra.mxu0 %v363
    %482 = vmatprep.subr.mxu0 0.0
    %483 = vmatpush1.msra.mxu0 %v364
    %484 = vmatprep.subr.mxu0 0.0
    %485 = vmatpush1.msra.mxu0 %v365
    %486 = vmatprep.subr.mxu0 0.0
    %487 = vmatpush1.msra.mxu0 %v366
    %488 = vmatprep.subr.mxu0 0.0
    %489 = vmatpush1.msra.mxu0 %v367
    %490 = vmatprep.subr.mxu0 0.0
    %491 = vmatpush1.msra.mxu0 %v368
    %492 = vmatprep.subr.mxu0 0.0
    %493 = vmatpush1.msra.mxu0 %v369
    %494 = vmatprep.subr.mxu0 0.0
    %495 = vmatpush1.msra.mxu0 0.0
    %496 = vmatprep.subr.mxu0 0.0
    %497 = vmatpush1.msra.mxu0 0.0
    %498 = vmatprep.subr.mxu0 0.0
    %499 = vmatpush1.msra.mxu0 0.0
    %500 = vmatprep.subr.mxu0 0.0
    %501 = vmatpush1.msra.mxu0 0.0
    %502 = vmatprep.subr.mxu0 0.0
    %503 = vmatpush1.msra.mxu0 0.0
    %504 = vmatprep.subr.mxu0 0.0
    %505 = vmatpush1.msra.mxu0 0.0
    %506 = vmatprep.subr.mxu0 0.0
    %507 = vmatpush1.msra.mxu0 0.0
    %508 = vmatprep.subr.mxu0 0.0
    %509 = vmatpush1.msra.mxu0 0.0
    %510 = vmatprep.subr.mxu0 0.0
    %511 = vmatpush1.msra.mxu0 0.0
    %512 = vmatprep.subr.mxu0 0.0
    %513 = vmatpush1.msra.mxu0 0.0
    %514 = vmatprep.subr.mxu0 0.0
    %515 = vmatpush1.msra.mxu0 0.0
    %516 = vmatprep.subr.mxu0 0.0
    %517 = vmatpush1.msra.mxu0 0.0
    %518 = vmatprep.subr.mxu0 0.0
    %519 = vmatpush1.msra.mxu0 0.0
    %520 = vmatprep.subr.mxu0 0.0
    %521 = vmatpush1.msra.mxu0 0.0
    %522 = vmatprep.subr.mxu0 0.0
    %523 = vmatpush1.msra.mxu0 0.0
    %524 = vmatprep.subr.mxu0 0.0
    %525 = vmatpush1.msra.mxu0 0.0
    %526 = vmatprep.mubr.f32.mxu0 0.0
    %527 = vmatmul.mubr.f32.gmra.mrb[0].mxu0 %v304
    %v528 = vpop.f32.mrb[0].mxu0
    %v529 = vadd.f32 %v444, %v528
    %v530 = vpop.f32.mrb[0].mxu0
    %531 = vmatprep.mubr.f32.mxu0 0.0
    %532 = vmatmul.mubr.f32.gmra.mrb[0].mxu0 %v309
    %v533 = vpop.f32.mrb[0].mxu0
    %v534 = vadd.f32 %v449, %v533
    %v535 = vpop.f32.mrb[0].mxu0
    %536 = vmatprep.mubr.f32.mxu0 0.0
    %537 = vmatmul.mubr.f32.gmra.mrb[0].mxu0 %v314
    %v538 = vpop.f32.mrb[0].mxu0
    %v539 = vadd.f32 %v454, %v538
    %v540 = vpop.f32.mrb[0].mxu0
    %541 = vmatprep.mubr.f32.mxu0 0.0
    %542 = vmatmul.mubr.f32.gmra.mrb[0].mxu0 %v319
    %v543 = vpop.f32.mrb[0].mxu0
    %v544 = vadd.f32 %v459, %v543
    %v545 = vpop.f32.mrb[0].mxu0
    %546 = vdwg.mxu0
    %v547 = vmul.f32 %v529, %v529
    %v548 = vmul.f32 %v534, %v534
    %v549 = vmul.f32 %v539, %v539
    %v550 = vmul.f32 %v544, %v544
    %v551 = vadd.f32 %v529, %v534
    %v552 = vadd.f32 %v551, %v539
    %v553 = vadd.f32 %v552, %v544
    %v554 = vrot.slane %v553, 4
    %v555 = vadd.f32 %v553, %v554
    %v556 = vrot.slane %v555, 2
    %v557 = vadd.f32 %v555, %v556
    %v558 = vrot.slane %v557, 1
    %v559 = vadd.f32 %v557, %v558
    %v560 = vadd.f32 %v547, %v548
    %v561 = vadd.f32 %v560, %v549
    %v562 = vadd.f32 %v561, %v550
    %v563 = vrot.slane %v562, 4
    %v564 = vadd.f32 %v562, %v563
    %v565 = vrot.slane %v564, 2
    %v566 = vadd.f32 %v564, %v565
    %v567 = vrot.slane %v566, 1
    %v568 = vadd.f32 %v566, %v567
    %569 = vmatprep.subr.mxu0 %v64
    %570 = vmatpush1.msra.mxu0 %v63
    %571 = vmatprep.subr.mxu0 %v66
    %572 = vmatpush1.msra.mxu0 %v65
    %573 = vmatprep.subr.mxu0 %v68
    %574 = vmatpush1.msra.mxu0 %v67
    %575 = vmatprep.subr.mxu0 %v70
    %576 = vmatpush1.msra.mxu0 %v69
    %577 = vmatprep.subr.mxu0 %v72
    %578 = vmatpush1.msra.mxu0 %v71
    %579 = vmatprep.subr.mxu0 %v74
    %580 = vmatpush1.msra.mxu0 %v73
    %581 = vmatprep.subr.mxu0 %v76
    %582 = vmatpush1.msra.mxu0 %v75
    %583 = vmatprep.subr.mxu0 %v78
    %584 = vmatpush1.msra.mxu0 %v77
    %585 = vmatprep.subr.mxu0 %v80
    %586 = vmatpush1.msra.mxu0 %v79
    %587 = vmatprep.subr.mxu0 %v82
    %588 = vmatpush1.msra.mxu0 %v81
    %589 = vmatprep.subr.mxu0 %v84
    %590 = vmatpush1.msra.mxu0 %v83
    %591 = vmatprep.subr.mxu0 %v86
    %592 = vmatpush1.msra.mxu0 %v85
    %593 = vmatprep.subr.mxu0 %v88
    %594 = vmatpush1.msra.mxu0 %v87
    %595 = vmatprep.subr.mxu0 %v90
    %596 = vmatpush1.msra.mxu0 %v89
    %597 = vmatprep.subr.mxu0 %v92
    %598 = vmatpush1.msra.mxu0 %v91
    %599 = vmatprep.subr.mxu0 %v94
    %600 = vmatpush1.msra.mxu0 %v93
    %601 = vmatprep.subr.mxu0 %v96
    %602 = vmatpush1.msra.mxu0 %v95
    %603 = vmatprep.subr.mxu0 %v98
    %604 = vmatpush1.msra.mxu0 %v97
    %605 = vmatprep.subr.mxu0 %v100
    %606 = vmatpush1.msra.mxu0 %v99
    %607 = vmatprep.subr.mxu0 %v102
    %608 = vmatpush1.msra.mxu0 %v101
    %609 = vmatprep.subr.mxu0 %v104
    %610 = vmatpush1.msra.mxu0 %v103
    %611 = vmatprep.subr.mxu0 %v106
    %612 = vmatpush1.msra.mxu0 %v105
    %613 = vmatprep.subr.mxu0 %v108
    %614 = vmatpush1.msra.mxu0 %v107
    %615 = vmatprep.subr.mxu0 %v110
    %616 = vmatpush1.msra.mxu0 %v109
    %617 = vmatprep.subr.mxu0 %v112
    %618 = vmatpush1.msra.mxu0 %v111
    %619 = vmatprep.subr.mxu0 %v114
    %620 = vmatpush1.msra.mxu0 %v113
    %621 = vmatprep.subr.mxu0 %v116
    %622 = vmatpush1.msra.mxu0 %v115
    %623 = vmatprep.subr.mxu0 %v118
    %624 = vmatpush1.msra.mxu0 %v117
    %625 = vmatprep.subr.mxu0 %v120
    %626 = vmatpush1.msra.mxu0 %v119
    %627 = vmatprep.subr.mxu0 %v122
    %628 = vmatpush1.msra.mxu0 %v121
    %629 = vmatprep.subr.mxu0 %v124
    %630 = vmatpush1.msra.mxu0 %v123
    %631 = vmatprep.subr.mxu0 %v126
    %632 = vmatpush1.msra.mxu0 %v125
    %633 = vmatprep.mubr.f32.mxu0 %v568
    %634 = vmatmul.mubr.f32.gmra.mrb[0].mxu0 %v559
    %v635 = vpop.f32.mrb[0].mxu0
    %v636 = vadd.f32 0.0, %v635
    %v637 = vpop.f32.mrb[0].mxu0
    %v638 = vadd.f32 0.0, %v637
    %639 = vdwg.mxu0
    %v640 = vmul.f32 %v636, %v636
    %v641 = vsub.f32 %v638, %v640
    %v642 = vmax.f32 %v641, 0.0
    %v643 = vadd.f32 %v642, 1e-05
    %v644 = vrsqrt.pop %v643
    %v645 = vmul.f32 %v61, %v644
    %v646 = vmul.f32 %v636, %v645
    %v647 = vsub.f32 %v62, %v646
    %v649 = vlaneseq
    %v650 = vshrl.u32 %v649, 7
    %v651 = vsub.s32 0, %v650
    %v652 = vrot.slane %v645, %v651
    %v654 = vmul.f32 %v529, %v652
    %v655 = vmul.f32 %v534, %v652
    %v656 = vmul.f32 %v539, %v652
    %v657 = vmul.f32 %v544, %v652
    %v659 = vlaneseq
    %v660 = vshrl.u32 %v659, 7
    %v661 = vsub.s32 0, %v660
    %v662 = vrot.slane %v647, %v661
    %v664 = vadd.f32 %v654, %v662
    %v665 = vadd.f32 %v655, %v662
    %v666 = vadd.f32 %v656, %v662
    %v667 = vadd.f32 %v657, %v662
    %v668 = vmax.f32 %v664, 0.0
    %v669 = vmax.f32 %v665, 0.0
    %v670 = vmax.f32 %v666, 0.0
    %v671 = vmax.f32 %v667, 0.0
    %672 = vmatprep.subr.mxu0 0.0
    %673 = vmatpush1.msra.mxu0 %v668
    %674 = vmatprep.subr.mxu0 0.0
    %675 = vmatpush1.msra.mxu0 %v669
    %676 = vmatprep.subr.mxu0 0.0
    %677 = vmatpush1.msra.mxu0 %v670
    %678 = vmatprep.subr.mxu0 0.0
    %679 = vmatpush1.msra.mxu0 %v671
    %680 = vmatprep.subr.mxu0 0.0
    %681 = vmatpush1.msra.mxu0 0.0
    %682 = vmatprep.subr.mxu0 0.0
    %683 = vmatpush1.msra.mxu0 0.0
    %684 = vmatprep.subr.mxu0 0.0
    %685 = vmatpush1.msra.mxu0 0.0
    %686 = vmatprep.subr.mxu0 0.0
    %687 = vmatpush1.msra.mxu0 0.0
    %688 = vmatprep.subr.mxu0 0.0
    %689 = vmatpush1.msra.mxu0 0.0
    %690 = vmatprep.subr.mxu0 0.0
    %691 = vmatpush1.msra.mxu0 0.0
    %692 = vmatprep.subr.mxu0 0.0
    %693 = vmatpush1.msra.mxu0 0.0
    %694 = vmatprep.subr.mxu0 0.0
    %695 = vmatpush1.msra.mxu0 0.0
    %696 = vmatprep.subr.mxu0 0.0
    %697 = vmatpush1.msra.mxu0 0.0
    %698 = vmatprep.subr.mxu0 0.0
    %699 = vmatpush1.msra.mxu0 0.0
    %700 = vmatprep.subr.mxu0 0.0
    %701 = vmatpush1.msra.mxu0 0.0
    %702 = vmatprep.subr.mxu0 0.0
    %703 = vmatpush1.msra.mxu0 0.0
    %704 = vmatprep.subr.mxu0 0.0
    %705 = vmatpush1.msra.mxu0 0.0
    %706 = vmatprep.subr.mxu0 0.0
    %707 = vmatpush1.msra.mxu0 0.0
    %708 = vmatprep.subr.mxu0 0.0
    %709 = vmatpush1.msra.mxu0 0.0
    %710 = vmatprep.subr.mxu0 0.0
    %711 = vmatpush1.msra.mxu0 0.0
    %712 = vmatprep.subr.mxu0 0.0
    %713 = vmatpush1.msra.mxu0 0.0
    %714 = vmatprep.subr.mxu0 0.0
    %715 = vmatpush1.msra.mxu0 0.0
    %716 = vmatprep.subr.mxu0 0.0
    %717 = vmatpush1.msra.mxu0 0.0
    %718 = vmatprep.subr.mxu0 0.0
    %719 = vmatpush1.msra.mxu0 0.0
    %720 = vmatprep.subr.mxu0 0.0
    %721 = vmatpush1.msra.mxu0 0.0
    %722 = vmatprep.subr.mxu0 0.0
    %723 = vmatpush1.msra.mxu0 0.0
    %724 = vmatprep.subr.mxu0 0.0
    %725 = vmatpush1.msra.mxu0 0.0
    %726 = vmatprep.subr.mxu0 0.0
    %727 = vmatpush1.msra.mxu0 0.0
    %728 = vmatprep.subr.mxu0 0.0
    %729 = vmatpush1.msra.mxu0 0.0
    %730 = vmatprep.subr.mxu0 0.0
    %731 = vmatpush1.msra.mxu0 0.0
    %732 = vmatprep.subr.mxu0 0.0
    %733 = vmatpush1.msra.mxu0 0.0
    %734 = vmatprep.subr.mxu0 0.0
    %735 = vmatpush1.msra.mxu0 0.0
    %736 = vmatprep.mubr.f32.mxu0 0.0
    %737 = vmatmul.mubr.f32.gmra.mrb[0].mxu0 %v129
    %v738 = vpop.f32.mrb[0].mxu0
    %v739 = vadd.f32 0.0, %v738
    %v740 = vpop.f32.mrb[0].mxu0
    %741 = vmatprep.mubr.f32.mxu0 0.0
    %742 = vmatmul.mubr.f32.gmra.mrb[0].mxu0 %v132
    %v743 = vpop.f32.mrb[0].mxu0
    %v744 = vadd.f32 0.0, %v743
    %v745 = vpop.f32.mrb[0].mxu0
    %746 = vmatprep.mubr.f32.mxu0 0.0
    %747 = vmatmul.mubr.f32.gmra.mrb[0].mxu0 %v135
    %v748 = vpop.f32.mrb[0].mxu0
    %v749 = vadd.f32 0.0, %v748
    %v750 = vpop.f32.mrb[0].mxu0
    %751 = vmatprep.mubr.f32.mxu0 0.0
    %752 = vmatmul.mubr.f32.gmra.mrb[0].mxu0 %v138
    %v753 = vpop.f32.mrb[0].mxu0
    %v754 = vadd.f32 0.0, %v753
    %v755 = vpop.f32.mrb[0].mxu0
    %756 = vdwg.mxu0
    %757 = vmatprep.subr.mxu0 0.0
    %758 = vmatpush1.msra.mxu0 %v668
    %759 = vmatprep.subr.mxu0 0.0
    %760 = vmatpush1.msra.mxu0 %v669
    %761 = vmatprep.subr.mxu0 0.0
    %762 = vmatpush1.msra.mxu0 %v670
    %763 = vmatprep.subr.mxu0 0.0
    %764 = vmatpush1.msra.mxu0 %v671
    %765 = vmatprep.subr.mxu0 0.0
    %766 = vmatpush1.msra.mxu0 0.0
    %767 = vmatprep.subr.mxu0 0.0
    %768 = vmatpush1.msra.mxu0 0.0
    %769 = vmatprep.subr.mxu0 0.0
    %770 = vmatpush1.msra.mxu0 0.0
    %771 = vmatprep.subr.mxu0 0.0
    %772 = vmatpush1.msra.mxu0 0.0
    %773 = vmatprep.subr.mxu0 0.0
    %774 = vmatpush1.msra.mxu0 0.0
    %775 = vmatprep.subr.mxu0 0.0
    %776 = vmatpush1.msra.mxu0 0.0
    %777 = vmatprep.subr.mxu0 0.0
    %778 = vmatpush1.msra.mxu0 0.0
    %779 = vmatprep.subr.mxu0 0.0
    %780 = vmatpush1.msra.mxu0 0.0
    %781 = vmatprep.subr.mxu0 0.0
    %782 = vmatpush1.msra.mxu0 0.0
    %783 = vmatprep.subr.mxu0 0.0
    %784 = vmatpush1.msra.mxu0 0.0
    %785 = vmatprep.subr.mxu0 0.0
    %786 = vmatpush1.msra.mxu0 0.0
    %787 = vmatprep.subr.mxu0 0.0
    %788 = vmatpush1.msra.mxu0 0.0
    %789 = vmatprep.subr.mxu0 0.0
    %790 = vmatpush1.msra.mxu0 0.0
    %791 = vmatprep.subr.mxu0 0.0
    %792 = vmatpush1.msra.mxu0 0.0
    %793 = vmatprep.subr.mxu0 0.0
    %794 = vmatpush1.msra.mxu0 0.0
    %795 = vmatprep.subr.mxu0 0.0
    %796 = vmatpush1.msra.mxu0 0.0
    %797 = vmatprep.subr.mxu0 0.0
    %798 = vmatpush1.msra.mxu0 0.0
    %799 = vmatprep.subr.mxu0 0.0
    %800 = vmatpush1.msra.mxu0 0.0
    %801 = vmatprep.subr.mxu0 0.0
    %802 = vmatpush1.msra.mxu0 0.0
    %803 = vmatprep.subr.mxu0 0.0
    %804 = vmatpush1.msra.mxu0 0.0
    %805 = vmatprep.subr.mxu0 0.0
    %806 = vmatpush1.msra.mxu0 0.0
    %807 = vmatprep.subr.mxu0 0.0
    %808 = vmatpush1.msra.mxu0 0.0
    %809 = vmatprep.subr.mxu0 0.0
    %810 = vmatpush1.msra.mxu0 0.0
    %811 = vmatprep.subr.mxu0 0.0
    %812 = vmatpush1.msra.mxu0 0.0
    %813 = vmatprep.subr.mxu0 0.0
    %814 = vmatpush1.msra.mxu0 0.0
    %815 = vmatprep.subr.mxu0 0.0
    %816 = vmatpush1.msra.mxu0 0.0
    %817 = vmatprep.subr.mxu0 0.0
    %818 = vmatpush1.msra.mxu0 0.0
    %819 = vmatprep.subr.mxu0 0.0
    %820 = vmatpush1.msra.mxu0 0.0
    %821 = vmatprep.mubr.f32.mxu0 0.0
    %822 = vmatmul.mubr.f32.gmra.mrb[0].mxu0 %v226
    %v823 = vpop.f32.mrb[0].mxu0
    %v824 = vadd.f32 0.0, %v823
    %v825 = vpop.f32.mrb[0].mxu0
    %826 = vmatprep.mubr.f32.mxu0 0.0
    %827 = vmatmul.mubr.f32.gmra.mrb[0].mxu0 %v229
    %v828 = vpop.f32.mrb[0].mxu0
    %v829 = vadd.f32 0.0, %v828
    %v830 = vpop.f32.mrb[0].mxu0
    %831 = vmatprep.mubr.f32.mxu0 0.0
    %832 = vmatmul.mubr.f32.gmra.mrb[0].mxu0 %v232
    %v833 = vpop.f32.mrb[0].mxu0
    %v834 = vadd.f32 0.0, %v833
    %v835 = vpop.f32.mrb[0].mxu0
    %836 = vmatprep.mubr.f32.mxu0 0.0
    %837 = vmatmul.mubr.f32.gmra.mrb[0].mxu0 %v235
    %v838 = vpop.f32.mrb[0].mxu0
    %v839 = vadd.f32 0.0, %v838
    %v840 = vpop.f32.mrb[0].mxu0
    %841 = vdwg.mxu0
    %v842 = vld [vmem:[#allocation2] sm:$0xff]
    %v843 = vld [vmem:[#allocation2 + $0x8] sm:$0xff]
    %v844 = vld [vmem:[#allocation2 + $0x10] sm:$0xff]
    %v845 = vld [vmem:[#allocation2 + $0x18] sm:$0xff]
    %v846 = vld [vmem:[#allocation2 + $0x20] sm:$0xff]
    %v847 = vld [vmem:[#allocation2 + $0x28] sm:$0xff]
    %v848 = vld [vmem:[#allocation2 + $0x30] sm:$0xff]
    %v849 = vld [vmem:[#allocation2 + $0x38] sm:$0xff]
    %v850 = vld [vmem:[#allocation2 + $0x40] sm:$0xff]
    %v851 = vld [vmem:[#allocation2 + $0x48] sm:$0xff]
    %v852 = vld [vmem:[#allocation2 + $0x50] sm:$0xff]
    %v853 = vld [vmem:[#allocation2 + $0x58] sm:$0xff]
    %v854 = vld [vmem:[#allocation2 + $0x60] sm:$0xff]
    %v855 = vld [vmem:[#allocation2 + $0x68] sm:$0xff]
    %v856 = vld [vmem:[#allocation2 + $0x70] sm:$0xff]
    %v857 = vld [vmem:[#allocation2 + $0x78] sm:$0xff]
    %v858 = vld [vmem:[#allocation2 + $0x80] sm:$0xff]
    %v859 = vld [vmem:[#allocation2 + $0x88] sm:$0xff]
    %v860 = vld [vmem:[#allocation2 + $0x90] sm:$0xff]
    %v861 = vld [vmem:[#allocation2 + $0x98] sm:$0xff]
    %v862 = vld [vmem:[#allocation2 + $0xa0] sm:$0xff]
    %v863 = vld [vmem:[#allocation2 + $0xa8] sm:$0xff]
    %v864 = vld [vmem:[#allocation2 + $0xb0] sm:$0xff]
    %v865 = vld [vmem:[#allocation2 + $0xb8] sm:$0xff]
    %v866 = vld [vmem:[#allocation2 + $0xc0] sm:$0xff]
    %v867 = vld [vmem:[#allocation2 + $0xc8] sm:$0xff]
    %v868 = vld [vmem:[#allocation2 + $0xd0] sm:$0xff]
    %v869 = vld [vmem:[#allocation2 + $0xd8] sm:$0xff]
    %v870 = vld [vmem:[#allocation2 + $0xe0] sm:$0xff]
    %v871 = vld [vmem:[#allocation2 + $0xe8] sm:$0xff]
    %v872 = vld [vmem:[#allocation2 + $0xf0] sm:$0xff]
    %v873 = vld [vmem:[#allocation2 + $0xf8] sm:$0xff]
    %v874 = vld [vmem:[#allocation2 + $0x100] sm:$0xff]
    %v875 = vld [vmem:[#allocation2 + $0x108] sm:$0xff]
    %v876 = vld [vmem:[#allocation2 + $0x110] sm:$0xff]
    %v877 = vld [vmem:[#allocation2 + $0x118] sm:$0xff]
    %v878 = vld [vmem:[#allocation2 + $0x120] sm:$0xff]
    %v879 = vld [vmem:[#allocation2 + $0x128] sm:$0xff]
    %v880 = vld [vmem:[#allocation2 + $0x130] sm:$0xff]
    %v881 = vld [vmem:[#allocation2 + $0x138] sm:$0xff]
    %v882 = vld [vmem:[#allocation2 + $0x140] sm:$0xff]
    %v883 = vld [vmem:[#allocation2 + $0x148] sm:$0xff]
    %v884 = vld [vmem:[#allocation2 + $0x150] sm:$0xff]
    %v885 = vld [vmem:[#allocation2 + $0x158] sm:$0xff]
    %v886 = vld [vmem:[#allocation2 + $0x160] sm:$0xff]
    %v887 = vld [vmem:[#allocation2 + $0x168] sm:$0xff]
    %v888 = vld [vmem:[#allocation2 + $0x170] sm:$0xff]
    %v889 = vld [vmem:[#allocation2 + $0x178] sm:$0xff]
    %v890 = vld [vmem:[%s6] sm:$0x1]
    %v892 = vlaneseq
    %v893 = vshrl.u32 %v892, 7
    %v894 = vsub.s32 0, %v893
    %v895 = vrot.slane %v890, %v894
    %897 = vmatprep.subr.mxu0 0.0
    %898 = vmatpush1.msra.mxu0 %v842
    %899 = vmatprep.subr.mxu0 0.0
    %900 = vmatpush1.msra.mxu0 %v843
    %901 = vmatprep.subr.mxu0 0.0
    %902 = vmatpush1.msra.mxu0 %v844
    %903 = vmatprep.subr.mxu0 0.0
    %904 = vmatpush1.msra.mxu0 %v845
    %905 = vmatprep.subr.mxu0 0.0
    %906 = vmatpush1.msra.mxu0 %v846
    %907 = vmatprep.subr.mxu0 0.0
    %908 = vmatpush1.msra.mxu0 %v847
    %909 = vmatprep.subr.mxu0 0.0
    %910 = vmatpush1.msra.mxu0 %v848
    %911 = vmatprep.subr.mxu0 0.0
    %912 = vmatpush1.msra.mxu0 %v849
    %913 = vmatprep.subr.mxu0 0.0
    %914 = vmatpush1.msra.mxu0 %v850
    %915 = vmatprep.subr.mxu0 0.0
    %916 = vmatpush1.msra.mxu0 %v851
    %917 = vmatprep.subr.mxu0 0.0
    %918 = vmatpush1.msra.mxu0 %v852
    %919 = vmatprep.subr.mxu0 0.0
    %920 = vmatpush1.msra.mxu0 %v853
    %921 = vmatprep.subr.mxu0 0.0
    %922 = vmatpush1.msra.mxu0 %v854
    %923 = vmatprep.subr.mxu0 0.0
    %924 = vmatpush1.msra.mxu0 %v855
    %925 = vmatprep.subr.mxu0 0.0
    %926 = vmatpush1.msra.mxu0 %v856
    %927 = vmatprep.subr.mxu0 0.0
    %928 = vmatpush1.msra.mxu0 %v857
    %929 = vmatprep.subr.mxu0 0.0
    %930 = vmatpush1.msra.mxu0 %v858
    %931 = vmatprep.subr.mxu0 0.0
    %932 = vmatpush1.msra.mxu0 %v859
    %933 = vmatprep.subr.mxu0 0.0
    %934 = vmatpush1.msra.mxu0 %v860
    %935 = vmatprep.subr.mxu0 0.0
    %936 = vmatpush1.msra.mxu0 %v861
    %937 = vmatprep.subr.mxu0 0.0
    %938 = vmatpush1.msra.mxu0 %v862
    %939 = vmatprep.subr.mxu0 0.0
    %940 = vmatpush1.msra.mxu0 %v863
    %941 = vmatprep.subr.mxu0 0.0
    %942 = vmatpush1.msra.mxu0 %v864
    %943 = vmatprep.subr.mxu0 0.0
    %944 = vmatpush1.msra.mxu0 %v865
    %945 = vmatprep.subr.mxu0 0.0
    %946 = vmatpush1.msra.mxu0 %v866
    %947 = vmatprep.subr.mxu0 0.0
    %948 = vmatpush1.msra.mxu0 %v867
    %949 = vmatprep.subr.mxu0 0.0
    %950 = vmatpush1.msra.mxu0 %v868
    %951 = vmatprep.subr.mxu0 0.0
    %952 = vmatpush1.msra.mxu0 %v869
    %953 = vmatprep.subr.mxu0 0.0
    %954 = vmatpush1.msra.mxu0 %v870
    %955 = vmatprep.subr.mxu0 0.0
    %956 = vmatpush1.msra.mxu0 %v871
    %957 = vmatprep.subr.mxu0 0.0
    %958 = vmatpush1.msra.mxu0 %v872
    %959 = vmatprep.subr.mxu0 0.0
    %960 = vmatpush1.msra.mxu0 %v873
    %961 = vmatprep.mubr.f32.mxu0 %v668
    %962 = vmatmul.mubr.f32.gmra.mrb[0].mxu0 %v739
    %v963 = vpop.f32.mrb[0].mxu0
    %v964 = vadd.f32 %v895, %v963
    %v965 = vpop.f32.mrb[0].mxu0
    %966 = vmatprep.mubr.f32.mxu0 %v669
    %967 = vmatmul.mubr.f32.gmra.mrb[0].mxu0 %v744
    %v968 = vpop.f32.mrb[0].mxu0
    %v969 = vadd.f32 %v895, %v968
    %v970 = vpop.f32.mrb[0].mxu0
    %971 = vmatprep.mubr.f32.mxu0 %v670
    %972 = vmatmul.mubr.f32.gmra.mrb[0].mxu0 %v749
    %v973 = vpop.f32.mrb[0].mxu0
    %v974 = vadd.f32 %v895, %v973
    %v975 = vpop.f32.mrb[0].mxu0
    %976 = vmatprep.mubr.f32.mxu0 %v671
    %977 = vmatmul.mubr.f32.gmra.mrb[0].mxu0 %v754
    %v978 = vpop.f32.mrb[0].mxu0
    %v979 = vadd.f32 %v895, %v978
    %v980 = vpop.f32.mrb[0].mxu0
    %981 = vdwg.mxu0
    %982 = vmatprep.subr.mxu0 0.0
    %983 = vmatpush1.msra.mxu0 %v874
    %984 = vmatprep.subr.mxu0 0.0
    %985 = vmatpush1.msra.mxu0 %v875
    %986 = vmatprep.subr.mxu0 0.0
    %987 = vmatpush1.msra.mxu0 %v876
    %988 = vmatprep.subr.mxu0 0.0
    %989 = vmatpush1.msra.mxu0 %v877
    %990 = vmatprep.subr.mxu0 0.0
    %991 = vmatpush1.msra.mxu0 %v878
    %992 = vmatprep.subr.mxu0 0.0
    %993 = vmatpush1.msra.mxu0 %v879
    %994 = vmatprep.subr.mxu0 0.0
    %995 = vmatpush1.msra.mxu0 %v880
    %996 = vmatprep.subr.mxu0 0.0
    %997 = vmatpush1.msra.mxu0 %v881
    %998 = vmatprep.subr.mxu0 0.0
    %999 = vmatpush1.msra.mxu0 %v882
    %1000 = vmatprep.subr.mxu0 0.0
    %1001 = vmatpush1.msra.mxu0 %v883
    %1002 = vmatprep.subr.mxu0 0.0
    %1003 = vmatpush1.msra.mxu0 %v884
    %1004 = vmatprep.subr.mxu0 0.0
    %1005 = vmatpush1.msra.mxu0 %v885
    %1006 = vmatprep.subr.mxu0 0.0
    %1007 = vmatpush1.msra.mxu0 %v886
    %1008 = vmatprep.subr.mxu0 0.0
    %1009 = vmatpush1.msra.mxu0 %v887
    %1010 = vmatprep.subr.mxu0 0.0
    %1011 = vmatpush1.msra.mxu0 %v888
    %1012 = vmatprep.subr.mxu0 0.0
    %1013 = vmatpush1.msra.mxu0 %v889
    %1014 = vmatprep.subr.mxu0 0.0
    %1015 = vmatpush1.msra.mxu0 0.0
    %1016 = vmatprep.subr.mxu0 0.0
    %1017 = vmatpush1.msra.mxu0 0.0
    %1018 = vmatprep.subr.mxu0 0.0
    %1019 = vmatpush1.msra.mxu0 0.0
    %1020 = vmatprep.subr.mxu0 0.0
    %1021 = vmatpush1.msra.mxu0 0.0
    %1022 = vmatprep.subr.mxu0 0.0
    %1023 = vmatpush1.msra.mxu0 0.0
    %1024 = vmatprep.subr.mxu0 0.0
    %1025 = vmatpush1.msra.mxu0 0.0
    %1026 = vmatprep.subr.mxu0 0.0
    %1027 = vmatpush1.msra.mxu0 0.0
    %1028 = vmatprep.subr.mxu0 0.0
    %1029 = vmatpush1.msra.mxu0 0.0
    %1030 = vmatprep.subr.mxu0 0.0
    %1031 = vmatpush1.msra.mxu0 0.0
    %1032 = vmatprep.subr.mxu0 0.0
    %1033 = vmatpush1.msra.mxu0 0.0
    %1034 = vmatprep.subr.mxu0 0.0
    %1035 = vmatpush1.msra.mxu0 0.0
    %1036 = vmatprep.subr.mxu0 0.0
    %1037 = vmatpush1.msra.mxu0 0.0
    %1038 = vmatprep.subr.mxu0 0.0
    %1039 = vmatpush1.msra.mxu0 0.0
    %1040 = vmatprep.subr.mxu0 0.0
    %1041 = vmatpush1.msra.mxu0 0.0
    %1042 = vmatprep.subr.mxu0 0.0
    %1043 = vmatpush1.msra.mxu0 0.0
    %1044 = vmatprep.subr.mxu0 0.0
    %1045 = vmatpush1.msra.mxu0 0.0
    %1046 = vmatprep.mubr.f32.mxu0 0.0
    %1047 = vmatmul.mubr.f32.gmra.mrb[0].mxu0 %v824
    %v1048 = vpop.f32.mrb[0].mxu0
    %v1049 = vadd.f32 %v964, %v1048
    %v1050 = vpop.f32.mrb[0].mxu0
    %1051 = vmatprep.mubr.f32.mxu0 0.0
    %1052 = vmatmul.mubr.f32.gmra.mrb[0].mxu0 %v829
    %v1053 = vpop.f32.mrb[0].mxu0
    %v1054 = vadd.f32 %v969, %v1053
    %v1055 = vpop.f32.mrb[0].mxu0
    %1056 = vmatprep.mubr.f32.mxu0 0.0
    %1057 = vmatmul.mubr.f32.gmra.mrb[0].mxu0 %v834
    %v1058 = vpop.f32.mrb[0].mxu0
    %v1059 = vadd.f32 %v974, %v1058
    %v1060 = vpop.f32.mrb[0].mxu0
    %1061 = vmatprep.mubr.f32.mxu0 0.0
    %1062 = vmatmul.mubr.f32.gmra.mrb[0].mxu0 %v839
    %v1063 = vpop.f32.mrb[0].mxu0
    %v1064 = vadd.f32 %v979, %v1063
    %v1065 = vpop.f32.mrb[0].mxu0
    %1066 = vdwg.mxu0
    %v1067 = vmul.f32 %v1049, %v1049
    %v1068 = vmul.f32 %v1054, %v1054
    %v1069 = vmul.f32 %v1059, %v1059
    %v1070 = vmul.f32 %v1064, %v1064
    %v1071 = vadd.f32 %v1049, %v1054
    %v1072 = vadd.f32 %v1071, %v1059
    %v1073 = vadd.f32 %v1072, %v1064
    %v1074 = vrot.slane %v1073, 4
    %v1075 = vadd.f32 %v1073, %v1074
    %v1076 = vrot.slane %v1075, 2
    %v1077 = vadd.f32 %v1075, %v1076
    %v1078 = vrot.slane %v1077, 1
    %v1079 = vadd.f32 %v1077, %v1078
    %v1080 = vadd.f32 %v1067, %v1068
    %v1081 = vadd.f32 %v1080, %v1069
    %v1082 = vadd.f32 %v1081, %v1070
    %v1083 = vrot.slane %v1082, 4
    %v1084 = vadd.f32 %v1082, %v1083
    %v1085 = vrot.slane %v1084, 2
    %v1086 = vadd.f32 %v1084, %v1085
    %v1087 = vrot.slane %v1086, 1
    %v1088 = vadd.f32 %v1086, %v1087
    %1089 = vmatprep.subr.mxu0 %v64
    %1090 = vmatpush1.msra.mxu0 %v63
    %1091 = vmatprep.subr.mxu0 %v66
    %1092 = vmatpush1.msra.mxu0 %v65
    %1093 = vmatprep.subr.mxu0 %v68
    %1094 = vmatpush1.msra.mxu0 %v67
    %1095 = vmatprep.subr.mxu0 %v70
    %1096 = vmatpush1.msra.mxu0 %v69
    %1097 = vmatprep.subr.mxu0 %v72
    %1098 = vmatpush1.msra.mxu0 %v71
    %1099 = vmatprep.subr.mxu0 %v74
    %1100 = vmatpush1.msra.mxu0 %v73
    %1101 = vmatprep.subr.mxu0 %v76
    %1102 = vmatpush1.msra.mxu0 %v75
    %1103 = vmatprep.subr.mxu0 %v78
    %1104 = vmatpush1.msra.mxu0 %v77
    %1105 = vmatprep.subr.mxu0 %v80
    %1106 = vmatpush1.msra.mxu0 %v79
    %1107 = vmatprep.subr.mxu0 %v82
    %1108 = vmatpush1.msra.mxu0 %v81
    %1109 = vmatprep.subr.mxu0 %v84
    %1110 = vmatpush1.msra.mxu0 %v83
    %1111 = vmatprep.subr.mxu0 %v86
    %1112 = vmatpush1.msra.mxu0 %v85
    %1113 = vmatprep.subr.mxu0 %v88
    %1114 = vmatpush1.msra.mxu0 %v87
    %1115 = vmatprep.subr.mxu0 %v90
    %1116 = vmatpush1.msra.mxu0 %v89
    %1117 = vmatprep.subr.mxu0 %v92
    %1118 = vmatpush1.msra.mxu0 %v91
    %1119 = vmatprep.subr.mxu0 %v94
    %1120 = vmatpush1.msra.mxu0 %v93
    %1121 = vmatprep.subr.mxu0 %v96
    %1122 = vmatpush1.msra.mxu0 %v95
    %1123 = vmatprep.subr.mxu0 %v98
    %1124 = vmatpush1.msra.mxu0 %v97
    %1125 = vmatprep.subr.mxu0 %v100
    %1126 = vmatpush1.msra.mxu0 %v99
    %1127 = vmatprep.subr.mxu0 %v102
    %1128 = vmatpush1.msra.mxu0 %v101
    %1129 = vmatprep.subr.mxu0 %v104
    %1130 = vmatpush1.msra.mxu0 %v103
    %1131 = vmatprep.subr.mxu0 %v106
    %1132 = vmatpush1.msra.mxu0 %v105
    %1133 = vmatprep.subr.mxu0 %v108
    %1134 = vmatpush1.msra.mxu0 %v107
    %1135 = vmatprep.subr.mxu0 %v110
    %1136 = vmatpush1.msra.mxu0 %v109
    %1137 = vmatprep.subr.mxu0 %v112
    %1138 = vmatpush1.msra.mxu0 %v111
    %1139 = vmatprep.subr.mxu0 %v114
    %1140 = vmatpush1.msra.mxu0 %v113
    %1141 = vmatprep.subr.mxu0 %v116
    %1142 = vmatpush1.msra.mxu0 %v115
    %1143 = vmatprep.subr.mxu0 %v118
    %1144 = vmatpush1.msra.mxu0 %v117
    %1145 = vmatprep.subr.mxu0 %v120
    %1146 = vmatpush1.msra.mxu0 %v119
    %1147 = vmatprep.subr.mxu0 %v122
    %1148 = vmatpush1.msra.mxu0 %v121
    %1149 = vmatprep.subr.mxu0 %v124
    %1150 = vmatpush1.msra.mxu0 %v123
    %1151 = vmatprep.subr.mxu0 %v126
    %1152 = vmatpush1.msra.mxu0 %v125
    %1153 = vmatprep.mubr.f32.mxu0 %v1088
    %1154 = vmatmul.mubr.f32.gmra.mrb[0].mxu0 %v1079
    %v1155 = vpop.f32.mrb[0].mxu0
    %v1156 = vadd.f32 0.0, %v1155
    %v1157 = vpop.f32.mrb[0].mxu0
    %v1158 = vadd.f32 0.0, %v1157
    %1159 = vdwg.mxu0
    %v1160 = vmul.f32 %v1156, %v1156
    %v1161 = vsub.f32 %v1158, %v1160
    %v1162 = vmax.f32 %v1161, 0.0
    %v1163 = vadd.f32 %v1162, 1e-05
    %v1164 = vrsqrt.pop %v1163
    %v1165 = vmul.f32 %v61, %v1164
    %v1166 = vmul.f32 %v1156, %v1165
    %v1167 = vsub.f32 %v62, %v1166
    %v1169 = vlaneseq
    %v1170 = vshrl.u32 %v1169, 7
    %v1171 = vsub.s32 0, %v1170
    %v1172 = vrot.slane %v1165, %v1171
    %v1174 = vmul.f32 %v1049, %v1172
    %v1175 = vmul.f32 %v1054, %v1172
    %v1176 = vmul.f32 %v1059, %v1172
    %v1177 = vmul.f32 %v1064, %v1172
    %v1179 = vlaneseq
    %v1180 = vshrl.u32 %v1179, 7
    %v1181 = vsub.s32 0, %v1180
    %v1182 = vrot.slane %v1167, %v1181
    %v1184 = vadd.f32 %v1174, %v1182
    %v1185 = vadd.f32 %v1175, %v1182
    %v1186 = vadd.f32 %v1176, %v1182
    %v1187 = vadd.f32 %v1177, %v1182
    %v1188 = vadd.f32 %v1184, %v49
    %v1189 = vadd.f32 %v1185, %v50
    %v1190 = vadd.f32 %v1186, %v51
    %v1191 = vadd.f32 %v1187, %v52
    %1192 = vst [vmem:[%s10] sm:$0xff] %v1188
    %1193 = vst [vmem:[%s10 + $0x8] sm:$0xff] %v1189
    %1194 = vst [vmem:[%s10 + $0x10] sm:$0xff] %v1190
    %1195 = vst [vmem:[%s10 + $0x18] sm:$0xff] %v1191
    // Predicated region
    $region46: #{resnet_block_apply.1} parent=1 // pred_check
      _
    $region47: #{resnet_block_apply.1} parent=1 // pred_check_branch
      %1197 = sbr.rel (0) target = $region49
    $region48: #{resnet_block_apply.1} parent=1 // pred_region
      _
    $region49: #{resnet_block_apply.1} parent=1 // pred_fallthru
      _
    // Predicated region
    $region50: #{resnet_block_apply.1} parent=1 // pred_check
      _
    $region51: #{resnet_block_apply.1} parent=1 // pred_check_branch
      %1199 = sbr.rel (0) target = $region53
    $region52: #{resnet_block_apply.1} parent=1 // pred_region
      _
    $region53: #{resnet_block_apply.1} parent=1 // pred_fallthru
      _
    %1200 = vsyncpa [#allocation3], 1

</llo_original>
